<compile_context>
chip_gen: v7x
topology: tpu7x:2x2x1
jax: 0.10.0
libtpu: 0.0.40
codegen_flags: <defaults>
</compile_context>

<pallas_src>
import functools
import numpy as np
import jax
import jax.numpy as jnp
from jax.experimental import pallas as pl
from jax.experimental.pallas import tpu as pltpu

# dtype fed to the MXU (accumulation stays f32).  Set to jnp.float32 for
# bit-exact f32 parity checks against a PyTorch reference.
_MXU_DTYPE = jnp.bfloat16


# ----------------------------------------------------------------------------
# static bilinear (align_corners=True, as in the module) interpolation matrix
# ----------------------------------------------------------------------------
def _bilinear_matrix(out_size, in_size):
    """(out_size, in_size) 1-D interpolation matrix, align_corners=True."""
    if in_size == 1:
        m = np.zeros((out_size, in_size), dtype=np.float32)
        m[:, 0] = 1.0
        return m
    if out_size == 1:
        src = np.zeros((1,), dtype=np.float64)
    else:
        src = np.arange(out_size, dtype=np.float64) * (in_size - 1) / (out_size - 1)
    i0 = np.clip(np.floor(src).astype(np.int64), 0, in_size - 1)
    i1 = np.clip(i0 + 1, 0, in_size - 1)
    frac = (src - i0).astype(np.float32)
    m = np.zeros((out_size, in_size), dtype=np.float32)
    m[np.arange(out_size), i0] += (1.0 - frac)
    m[np.arange(out_size), i1] += frac
    return m


# ----------------------------------------------------------------------------
# chip-aware VMEM budget (static, no throwaway kernels)
# ----------------------------------------------------------------------------
@functools.lru_cache(maxsize=None)
def _vmem_limit_bytes():
    try:
        cap = int(getattr(pltpu.get_tpu_info(), "vmem_capacity_bytes", 0))
    except Exception:
        cap = 0
    if cap <= 0:
        return 40 * 1024 * 1024          # safe everywhere
    if cap <= 64 * 1024 * 1024:          # v7x-class: leave compiler headroom
        return 40 * 1024 * 1024
    return 96 * 1024 * 1024              # v5e / v6e (128 MiB physical)


def _round_up(x, m):
    return (x + m - 1) // m * m


# ----------------------------------------------------------------------------
# Up_ward.forward as one fused Pallas kernel
# ----------------------------------------------------------------------------
def up_ward_forward(x1_nchw, x2_nchw, params):
    """upsample(x1) -> F.pad -> cat([x2, x1], dim=1) -> (conv3x3+BN+ReLU) x 2."""
    N, C1, H1, W1 = x1_nchw.shape
    N2, C2, H2, W2 = x2_nchw.shape
    assert N == N2
    Ho, Wo = 2 * H1, 2 * W1
    Cin = C1 + C2
    w1 = params["w1"]
    w2 = params["w2"]
    assert w1.shape[:3] == (3, 3, Cin)
    Cmid = w1.shape[3]
    Cout = w2.shape[3]
    assert w2.shape[:3] == (3, 3, Cmid)

    # -- PyTorch pad arithmetic, reproduced exactly ---------------------------
    #    F.pad(x1, [x_change//2, x_change - y_change//2,
    #               y_change//2, y_change - x_change//2])   # [Wl, Wr, Ht, Hb]
    x_change = H2 - Ho
    y_change = W2 - Wo
    w_lo, w_hi = x_change // 2, x_change - y_change // 2
    h_lo, h_hi = y_change // 2, y_change - x_change // 2
    assert Ho + h_lo + h_hi == H2 and Wo + w_lo + w_hi == W2, "incompatible shapes"
    dst_h0, src_h0 = max(h_lo, 0), max(-h_lo, 0)     # negative pads = crop
    dst_w0, src_w0 = max(w_lo, 0), max(-w_lo, 0)
    cp_h = max(0, min(Ho - src_h0, H2 - dst_h0))
    cp_w = max(0, min(Wo - src_w0, W2 - dst_w0))

    cdt = _MXU_DTYPE
    out_dtype = x2_nchw.dtype

    # -- channel-major flat geometry ------------------------------------------
    Wp = W2 + 2                 # padded row width (1 px left + 1 px right)
    HpE = H2 + 3                # 1 top pad row + H2 data rows + 2 bottom pad rows
    SL = HpE * Wp               # flat padded slab length per channel
    L = H2 * Wp                 # conv output length (2 wrap-around cols per row)

    Cmid_p = max(8, _round_up(Cmid, 8))   # sublane-aligned channel padding
    Cout_p = max(8, _round_up(Cout, 8))

    # -- kernel operands ------------------------------------------------------
    # x1 stays in native NCHW, flattened to (C1*H1, W1): the W-direction
    # upsample is then a single 2-D MXU matmul.
    x1p = x1_nchw.reshape(N, C1 * H1, W1).astype(cdt)
    # x2 zero-padded (1 top, 2 bottom, 1 left, 1 right) and flattened per
    # channel: the skip connection arrives already in the conv-ready (C2, SL)
    # layout, so there is no in-kernel misaligned slab copy for it at all.
    x2p = jnp.pad(x2_nchw, ((0, 0), (0, 0), (1, 2), (1, 1))
                  ).reshape(N, C2, SL).astype(cdt)

    # 1-D interpolation matrices with F.pad / cropping folded in (zero rows /
    # columns produce the zero border directly).
    uh = _bilinear_matrix(Ho, H1)
    uw = _bilinear_matrix(Wo, W1)
    uh_pad = np.zeros((HpE, H1), np.float32)
    if cp_h > 0:
        uh_pad[1 + dst_h0:1 + dst_h0 + cp_h, :] = uh[src_h0:src_h0 + cp_h, :]
    uw_pad = np.zeros((Wp, W1), np.float32)
    if cp_w > 0:
        uw_pad[1 + dst_w0:1 + dst_w0 + cp_w, :] = uw[src_w0:src_w0 + cp_w, :]
    uh_op = jnp.asarray(uh_pad, cdt)            # (HpE, H1)
    uwT_op = jnp.asarray(uw_pad.T, cdt)         # (W1, Wp)

    # mask of valid columns within each Wp-wide row block (zeroes the
    # wrap-around garbage so it lands on the next slab's zero border).
    mask = jnp.asarray((np.arange(L) % Wp < W2).astype(np.float32).reshape(1, L))

    # Conv weights packed channel-major, one (Cout_dim, 3*Cin_dim) slab per dy
    # tap; column order = dx*Cin + cin with cin in torch.cat([x2, x1]) order.
    w1t = jnp.transpose(jnp.asarray(w1, jnp.float32), (0, 3, 1, 2))     # (3,Cmid,3,Cin)
    w1t = jnp.pad(w1t, ((0, 0), (0, Cmid_p - Cmid), (0, 0), (0, 0)))
    w1p = w1t.reshape(3, Cmid_p, 3 * Cin).astype(cdt)
    w2t = jnp.transpose(jnp.asarray(w2, jnp.float32), (0, 3, 1, 2))     # (3,Cout,3,Cmid)
    w2t = jnp.pad(w2t, ((0, 0), (0, Cout_p - Cout), (0, 0), (0, Cmid_p - Cmid)))
    w2p = w2t.reshape(3, Cout_p, 3 * Cmid_p).astype(cdt)

    # conv bias folded into the (inference-mode) BatchNorm affine, channel-major.
    s1 = jnp.pad(params["s1"], (0, Cmid_p - Cmid)
                 ).reshape(Cmid_p, 1).astype(jnp.float32)
    b1 = jnp.pad(params["b1"] * params["s1"] + params["t1"], (0, Cmid_p - Cmid)
                 ).reshape(Cmid_p, 1).astype(jnp.float32)
    s2 = jnp.pad(params["s2"], (0, Cout_p - Cout)
                 ).reshape(Cout_p, 1).astype(jnp.float32)
    b2 = jnp.pad(params["b2"] * params["s2"] + params["t2"], (0, Cout_p - Cout)
                 ).reshape(Cout_p, 1).astype(jnp.float32)

    def kernel(x1_ref, x2_ref, uh_ref, uw_ref, mask_ref, w1_ref, s1_ref, b1_ref,
               w2_ref, s2_ref, b2_ref, o_ref):
        # ---- separable bilinear x2 upsample (align_corners=True) ------------
        # W direction: one MXU matmul, F.pad columns folded into uw.
        bw = jnp.dot(x1_ref[0], uw_ref[...],
                     preferred_element_type=jnp.float32)            # (C1*H1, Wp)
        b3 = bw.reshape(C1, H1, Wp).astype(cdt)
        # H direction: channel-batched matmul, F.pad rows folded into uh.
        uh_b = jnp.broadcast_to(uh_ref[...], (C1, HpE, H1))
        up3 = jnp.einsum('crh,chs->crs', uh_b, b3,
                         preferred_element_type=jnp.float32)        # (C1, HpE, Wp)
        up = up3.reshape(C1, SL).astype(cdt)                        # padded flat slab

        x2v = x2_ref[0]                                             # (C2, SL) padded

        # ---- conv1 3x3 (pad=1) + BN + ReLU: 3 accumulated K=3*Cin matmuls ---
        acc1 = None
        for dy in range(3):
            base = dy * Wp
            parts = []
            for dx in range(3):
                off = base + dx
                parts.append(x2v[:, off:off + L])   # skip channels (cat group 0)
                parts.append(up[:, off:off + L])    # upsampled channels (group 1)
            rhs = jnp.concatenate(parts, axis=0)                    # (3*Cin, L)
            t = jnp.dot(w1_ref[dy], rhs, preferred_element_type=jnp.float32)
            acc1 = t if acc1 is None else acc1 + t                  # (Cmid_p, L)
        h1 = jnp.maximum(acc1 * s1_ref[...] + b1_ref[...], 0.0)
        h1 = h1 * mask_ref[...]   # wrap-around cols -> exact zeros (next border)

        # next padded flat slab built as a value (no scratch, no re-zeroing).
        mid = jnp.concatenate(
            [jnp.zeros((Cmid_p, Wp + 1), cdt),
             h1.astype(cdt),
             jnp.zeros((Cmid_p, SL - Wp - 1 - L), cdt)], axis=1)    # (Cmid_p, SL)

        # ---- conv2 3x3 (pad=1) + BN + ReLU ----------------------------------
        acc2 = None
        for dy in range(3):
            base = dy * Wp
            rhs = jnp.concatenate(
                [mid[:, base + dx:base + dx + L] for dx in range(3)],
                axis=0)                                             # (3*Cmid_p, L)
            t = jnp.dot(w2_ref[dy], rhs, preferred_element_type=jnp.float32)
            acc2 = t if acc2 is None else acc2 + t                  # (Cout_p, L)
        h2 = jnp.maximum(acc2 * s2_ref[...] + b2_ref[...], 0.0)
        # lane-dense channel-major store; wrap-around cols stripped by caller.
        o_ref[0] = h2.astype(o_ref.dtype)

    # TODO(synk): for realistic decoder sizes on v7x (64 MiB VMEM/TC) add a
    #             row-tile grid axis with a 2-row halo so the per-step slabs
    #             stay within ~24-32 MiB; at these sizes one image fits easily.
    y = pl.pallas_call(
        kernel,
        out_shape=jax.ShapeDtypeStruct((N, Cout_p, L), out_dtype),
        grid=(N,),
        in_specs=[
            pl.BlockSpec((1, C1 * H1, W1), lambda n: (n, 0, 0)),        # x1 (NCHW flat)
            pl.BlockSpec((1, C2, SL), lambda n: (n, 0, 0)),             # x2 padded flat
            pl.BlockSpec((HpE, H1), lambda n: (0, 0)),                  # Uh (pad folded)
            pl.BlockSpec((W1, Wp), lambda n: (0, 0)),                   # Uw^T (pad folded)
            pl.BlockSpec((1, L), lambda n: (0, 0)),                     # valid-col mask
            pl.BlockSpec((3, Cmid_p, 3 * Cin), lambda n: (0, 0, 0)),    # conv1 weights
            pl.BlockSpec((Cmid_p, 1), lambda n: (0, 0)),                # bn1 scale
            pl.BlockSpec((Cmid_p, 1), lambda n: (0, 0)),                # bn1 bias
            pl.BlockSpec((3, Cout_p, 3 * Cmid_p), lambda n: (0, 0, 0)),  # conv2 weights
            pl.BlockSpec((Cout_p, 1), lambda n: (0, 0)),                # bn2 scale
            pl.BlockSpec((Cout_p, 1), lambda n: (0, 0)),                # bn2 bias
        ],
        out_specs=pl.BlockSpec((1, Cout_p, L), lambda n: (n, 0, 0)),
        compiler_params=pltpu.CompilerParams(
            dimension_semantics=("parallel",),      # N>=2 feeds both v7x cores
            vmem_limit_bytes=_vmem_limit_bytes(),
        ),
    )(x1p, x2p, uh_op, uwT_op, mask, w1p, s1, b1, w2p, s2, b2)

    # strip padded channels and the 2 wrap-around columns per row; the result
    # is already NCHW (no transpose needed).
    return y.reshape(N, Cout_p, H2, Wp)[:, :Cout, :, :W2]


# ----------------------------------------------------------------------------
# parameters (same structure/semantics as before)
# ----------------------------------------------------------------------------
def make_params(in_channel, out_channel, key):
    mid_channel = in_channel // 2
    k = jax.random.split(key, 4)
    eps = 1e-5
    # BatchNorm (inference): running_mean=0, running_var=1, affine gamma/beta.
    g1 = 1.0 + 0.1 * jnp.arange(mid_channel, dtype=jnp.float32)
    b1n = 0.01 * jnp.arange(mid_channel, dtype=jnp.float32)
    g2 = 1.0 + 0.1 * jnp.arange(out_channel, dtype=jnp.float32)
    b2n = 0.01 * jnp.arange(out_channel, dtype=jnp.float32)
    inv_std = 1.0 / jnp.sqrt(1.0 + eps)
    return {
        "w1": 0.1 * jax.random.normal(k[0], (3, 3, in_channel, mid_channel), jnp.float32),
        "b1": 0.05 * jax.random.normal(k[1], (mid_channel,), jnp.float32),
        "s1": g1 * inv_std,
        "t1": b1n,
        "w2": 0.1 * jax.random.normal(k[2], (3, 3, mid_channel, out_channel), jnp.float32),
        "b2": 0.05 * jax.random.normal(k[3], (out_channel,), jnp.float32),
        "s2": g2 * inv_std,
        "t2": b2n,
    }


if __name__ == "__main__":
    key = jax.random.PRNGKey(0)
    kx1, kx2, kp = jax.random.split(key, 3)

    # Up_ward(in_channel=8, out_channel=8); concat channels = c(x2) + c(x1) = 8
    in_channel, out_channel = 8, 8
    N = 2
    c1 = in_channel // 2       # channels of the low-res feature x1
    c2 = in_channel - c1       # channels of the skip connection x2
    H1, W1 = 8, 8              # x1 spatial
    H2, W2 = 16, 16            # x2 spatial (= 2x x1)

    x1 = jax.random.normal(kx1, (N, c1, H1, W1), jnp.float32)   # NCHW
    x2 = jax.random.normal(kx2, (N, c2, H2, W2), jnp.float32)   # NCHW
    params = make_params(in_channel, out_channel, kp)

    fwd = jax.jit(lambda a, b: up_ward_forward(a, b, params))
    y = fwd(x1, x2)
    jax.block_until_ready(y)

    assert y.shape == (N, out_channel, H2, W2), y.shape
    assert bool(jnp.all(jnp.isfinite(y)))
    print("KERNEL_OK")
</pallas_src>

<mosaic_0001>
module attributes {stable_mosaic.version = 11 : i64} {
  func.func @kernel(%arg0: i32, %arg1: memref<1x32x8xbf16, #tpu.memory_space<vmem>>, %arg2: memref<1x4x342xbf16, #tpu.memory_space<vmem>>, %arg3: memref<19x8xbf16, #tpu.memory_space<vmem>>, %arg4: memref<8x18xbf16, #tpu.memory_space<vmem>>, %arg5: memref<1x288xf32, #tpu.memory_space<vmem>>, %arg6: memref<3x8x24xbf16, #tpu.memory_space<vmem>>, %arg7: memref<8x1xf32, #tpu.memory_space<vmem>>, %arg8: memref<8x1xf32, #tpu.memory_space<vmem>>, %arg9: memref<3x8x24xbf16, #tpu.memory_space<vmem>>, %arg10: memref<8x1xf32, #tpu.memory_space<vmem>>, %arg11: memref<8x1xf32, #tpu.memory_space<vmem>>, %arg12: memref<1x8x288xf32, #tpu.memory_space<vmem>>) attributes {dimension_semantics = [#tpu.dimension_semantics<parallel>], iteration_bounds = array<i64: 2>, scalar_prefetch = 0 : i64, scratch_operands = 0 : i64, tpu.core_type = #tpu.core_type<tc>, window_params = [{transform_indices = @transform_0, window_bounds = array<i64: 1, 32, 8>}, {transform_indices = @transform_1, window_bounds = array<i64: 1, 4, 342>}, {pipeline_mode = #tpu.pipeline_mode<synchronous>, transform_indices = @transform_2, window_bounds = array<i64: 19, 8>}, {pipeline_mode = #tpu.pipeline_mode<synchronous>, transform_indices = @transform_3, window_bounds = array<i64: 8, 18>}, {pipeline_mode = #tpu.pipeline_mode<synchronous>, transform_indices = @transform_4, window_bounds = array<i64: 1, 288>}, {pipeline_mode = #tpu.pipeline_mode<synchronous>, transform_indices = @transform_5, window_bounds = array<i64: 3, 8, 24>}, {pipeline_mode = #tpu.pipeline_mode<synchronous>, transform_indices = @transform_6, window_bounds = array<i64: 8, 1>}, {pipeline_mode = #tpu.pipeline_mode<synchronous>, transform_indices = @transform_7, window_bounds = array<i64: 8, 1>}, {pipeline_mode = #tpu.pipeline_mode<synchronous>, transform_indices = @transform_8, window_bounds = array<i64: 3, 8, 24>}, {pipeline_mode = #tpu.pipeline_mode<synchronous>, transform_indices = @transform_9, window_bounds = array<i64: 8, 1>}, {pipeline_mode = #tpu.pipeline_mode<synchronous>, transform_indices = @transform_10, window_bounds = array<i64: 8, 1>}, {transform_indices = @transform_11, window_bounds = array<i64: 1, 8, 288>}]} {
    %c0 = arith.constant 0 : index
    %c0_0 = arith.constant 0 : index
    %c0_1 = arith.constant 0 : index
    %0 = vector.load %arg1[%c0, %c0_0, %c0_1] : memref<1x32x8xbf16, #tpu.memory_space<vmem>>, vector<1x32x8xbf16>
    %1 = vector.shape_cast %0 : vector<1x32x8xbf16> to vector<32x8xbf16>
    %c0_2 = arith.constant 0 : index
    %c0_3 = arith.constant 0 : index
    %2 = vector.load %arg4[%c0_2, %c0_3] : memref<8x18xbf16, #tpu.memory_space<vmem>>, vector<8x18xbf16>
    %cst = arith.constant dense<0.000000e+00> : vector<32x18xf32>
    %3 = tpu.matmul %1, %2, %cst {dimension_numbers = #tpu.dot_dimension_numbers<[1], [0], [0], [1], [0, 0, 1, 1], [], []>} : vector<32x8xbf16>, vector<8x18xbf16>, vector<32x18xf32> -> vector<32x18xf32>
    %4 = vector.shape_cast %3 : vector<32x18xf32> to vector<4x8x18xf32>
    %5 = arith.truncf %4 : vector<4x8x18xf32> to vector<4x8x18xbf16>
    %c0_4 = arith.constant 0 : index
    %c0_5 = arith.constant 0 : index
    %6 = vector.load %arg3[%c0_4, %c0_5] : memref<19x8xbf16, #tpu.memory_space<vmem>>, vector<19x8xbf16>
    %7 = vector.shape_cast %6 : vector<19x8xbf16> to vector<1x19x8xbf16>
    %8 = vector.broadcast %7 : vector<1x19x8xbf16> to vector<4x19x8xbf16>
    "tpu.trace_start"() <{level = 10 : i32, message = "crh,chs->crs"}> : () -> ()
    %cst_6 = arith.constant dense<0.000000e+00> : vector<4x19x18xf32>
    %9 = tpu.matmul %8, %5, %cst_6 {dimension_numbers = #tpu.dot_dimension_numbers<[2], [1], [1], [2], [0, 0, 0, 1, 1, 2], [0], [0]>} : vector<4x19x8xbf16>, vector<4x8x18xbf16>, vector<4x19x18xf32> -> vector<4x19x18xf32>
    "tpu.trace_stop"() : () -> ()
    %10 = vector.shape_cast %9 : vector<4x19x18xf32> to vector<4x342xf32>
    %11 = arith.truncf %10 : vector<4x342xf32> to vector<4x342xbf16>
    %c0_7 = arith.constant 0 : index
    %c0_8 = arith.constant 0 : index
    %c0_9 = arith.constant 0 : index
    %12 = vector.load %arg2[%c0_7, %c0_8, %c0_9] : memref<1x4x342xbf16, #tpu.memory_space<vmem>>, vector<1x4x342xbf16>
    %13 = vector.shape_cast %12 : vector<1x4x342xbf16> to vector<4x342xbf16>
    %14 = vector.extract_strided_slice %13 {offsets = [0, 0], sizes = [4, 288], strides = [1, 1]} : vector<4x342xbf16> to vector<4x288xbf16>
    %15 = vector.extract_strided_slice %11 {offsets = [0, 0], sizes = [4, 288], strides = [1, 1]} : vector<4x342xbf16> to vector<4x288xbf16>
    %16 = vector.extract_strided_slice %13 {offsets = [0, 1], sizes = [4, 288], strides = [1, 1]} : vector<4x342xbf16> to vector<4x288xbf16>
    %17 = vector.extract_strided_slice %11 {offsets = [0, 1], sizes = [4, 288], strides = [1, 1]} : vector<4x342xbf16> to vector<4x288xbf16>
    %18 = vector.extract_strided_slice %13 {offsets = [0, 2], sizes = [4, 288], strides = [1, 1]} : vector<4x342xbf16> to vector<4x288xbf16>
    %19 = vector.extract_strided_slice %11 {offsets = [0, 2], sizes = [4, 288], strides = [1, 1]} : vector<4x342xbf16> to vector<4x288xbf16>
    %20 = tpu.concatenate %14, %15, %16, %17, %18, %19 in 0 : vector<4x288xbf16>, vector<4x288xbf16>, vector<4x288xbf16>, vector<4x288xbf16>, vector<4x288xbf16>, vector<4x288xbf16> -> vector<24x288xbf16>
    %c0_10 = arith.constant 0 : index
    %c0_11 = arith.constant 0 : index
    %c0_12 = arith.constant 0 : index
    %21 = vector.load %arg6[%c0_10, %c0_11, %c0_12] : memref<3x8x24xbf16, #tpu.memory_space<vmem>>, vector<1x8x24xbf16>
    %22 = vector.shape_cast %21 : vector<1x8x24xbf16> to vector<8x24xbf16>
    %cst_13 = arith.constant dense<0.000000e+00> : vector<8x288xf32>
    %23 = tpu.matmul %22, %20, %cst_13 {dimension_numbers = #tpu.dot_dimension_numbers<[1], [0], [0], [1], [0, 0, 1, 1], [], []>} : vector<8x24xbf16>, vector<24x288xbf16>, vector<8x288xf32> -> vector<8x288xf32>
    %24 = vector.extract_strided_slice %13 {offsets = [0, 18], sizes = [4, 288], strides = [1, 1]} : vector<4x342xbf16> to vector<4x288xbf16>
    %25 = vector.extract_strided_slice %11 {offsets = [0, 18], sizes = [4, 288], strides = [1, 1]} : vector<4x342xbf16> to vector<4x288xbf16>
    %26 = vector.extract_strided_slice %13 {offsets = [0, 19], sizes = [4, 288], strides = [1, 1]} : vector<4x342xbf16> to vector<4x288xbf16>
    %27 = vector.extract_strided_slice %11 {offsets = [0, 19], sizes = [4, 288], strides = [1, 1]} : vector<4x342xbf16> to vector<4x288xbf16>
    %28 = vector.extract_strided_slice %13 {offsets = [0, 20], sizes = [4, 288], strides = [1, 1]} : vector<4x342xbf16> to vector<4x288xbf16>
    %29 = vector.extract_strided_slice %11 {offsets = [0, 20], sizes = [4, 288], strides = [1, 1]} : vector<4x342xbf16> to vector<4x288xbf16>
    %30 = tpu.concatenate %24, %25, %26, %27, %28, %29 in 0 : vector<4x288xbf16>, vector<4x288xbf16>, vector<4x288xbf16>, vector<4x288xbf16>, vector<4x288xbf16>, vector<4x288xbf16> -> vector<24x288xbf16>
    %c1 = arith.constant 1 : index
    %c0_14 = arith.constant 0 : index
    %c0_15 = arith.constant 0 : index
    %31 = vector.load %arg6[%c1, %c0_14, %c0_15] : memref<3x8x24xbf16, #tpu.memory_space<vmem>>, vector<1x8x24xbf16>
    %32 = vector.shape_cast %31 : vector<1x8x24xbf16> to vector<8x24xbf16>
    %cst_16 = arith.constant dense<0.000000e+00> : vector<8x288xf32>
    %33 = tpu.matmul %32, %30, %cst_16 {dimension_numbers = #tpu.dot_dimension_numbers<[1], [0], [0], [1], [0, 0, 1, 1], [], []>} : vector<8x24xbf16>, vector<24x288xbf16>, vector<8x288xf32> -> vector<8x288xf32>
    %34 = arith.addf %23, %33 : vector<8x288xf32>
    %35 = vector.extract_strided_slice %13 {offsets = [0, 36], sizes = [4, 288], strides = [1, 1]} : vector<4x342xbf16> to vector<4x288xbf16>
    %36 = vector.extract_strided_slice %11 {offsets = [0, 36], sizes = [4, 288], strides = [1, 1]} : vector<4x342xbf16> to vector<4x288xbf16>
    %37 = vector.extract_strided_slice %13 {offsets = [0, 37], sizes = [4, 288], strides = [1, 1]} : vector<4x342xbf16> to vector<4x288xbf16>
    %38 = vector.extract_strided_slice %11 {offsets = [0, 37], sizes = [4, 288], strides = [1, 1]} : vector<4x342xbf16> to vector<4x288xbf16>
    %39 = vector.extract_strided_slice %13 {offsets = [0, 38], sizes = [4, 288], strides = [1, 1]} : vector<4x342xbf16> to vector<4x288xbf16>
    %40 = vector.extract_strided_slice %11 {offsets = [0, 38], sizes = [4, 288], strides = [1, 1]} : vector<4x342xbf16> to vector<4x288xbf16>
    %41 = tpu.concatenate %35, %36, %37, %38, %39, %40 in 0 : vector<4x288xbf16>, vector<4x288xbf16>, vector<4x288xbf16>, vector<4x288xbf16>, vector<4x288xbf16>, vector<4x288xbf16> -> vector<24x288xbf16>
    %c2 = arith.constant 2 : index
    %c0_17 = arith.constant 0 : index
    %c0_18 = arith.constant 0 : index
    %42 = vector.load %arg6[%c2, %c0_17, %c0_18] : memref<3x8x24xbf16, #tpu.memory_space<vmem>>, vector<1x8x24xbf16>
    %43 = vector.shape_cast %42 : vector<1x8x24xbf16> to vector<8x24xbf16>
    %cst_19 = arith.constant dense<0.000000e+00> : vector<8x288xf32>
    %44 = tpu.matmul %43, %41, %cst_19 {dimension_numbers = #tpu.dot_dimension_numbers<[1], [0], [0], [1], [0, 0, 1, 1], [], []>} : vector<8x24xbf16>, vector<24x288xbf16>, vector<8x288xf32> -> vector<8x288xf32>
    %45 = arith.addf %34, %44 : vector<8x288xf32>
    %c0_20 = arith.constant 0 : index
    %c0_21 = arith.constant 0 : index
    %46 = vector.load %arg7[%c0_20, %c0_21] : memref<8x1xf32, #tpu.memory_space<vmem>>, vector<8x1xf32>
    %47 = vector.broadcast %46 : vector<8x1xf32> to vector<8x288xf32>
    %48 = arith.mulf %45, %47 : vector<8x288xf32>
    %c0_22 = arith.constant 0 : index
    %c0_23 = arith.constant 0 : index
    %49 = vector.load %arg8[%c0_22, %c0_23] : memref<8x1xf32, #tpu.memory_space<vmem>>, vector<8x1xf32>
    %50 = vector.broadcast %49 : vector<8x1xf32> to vector<8x288xf32>
    %51 = arith.addf %48, %50 : vector<8x288xf32>
    %cst_24 = arith.constant 0.000000e+00 : f32
    %52 = vector.broadcast %cst_24 : f32 to vector<8x288xf32>
    %53 = arith.maximumf %51, %52 : vector<8x288xf32>
    %c0_25 = arith.constant 0 : index
    %c0_26 = arith.constant 0 : index
    %54 = vector.load %arg5[%c0_25, %c0_26] : memref<1x288xf32, #tpu.memory_space<vmem>>, vector<1x288xf32>
    %55 = vector.broadcast %54 : vector<1x288xf32> to vector<8x288xf32>
    %56 = arith.mulf %53, %55 : vector<8x288xf32>
    %cst_27 = arith.constant 0.000000e+00 : bf16
    %57 = vector.broadcast %cst_27 : bf16 to vector<8x19xbf16>
    %58 = arith.truncf %56 : vector<8x288xf32> to vector<8x288xbf16>
    %cst_28 = arith.constant 0.000000e+00 : bf16
    %59 = vector.broadcast %cst_28 : bf16 to vector<8x35xbf16>
    %60 = tpu.concatenate %57, %58, %59 in 1 : vector<8x19xbf16>, vector<8x288xbf16>, vector<8x35xbf16> -> vector<8x342xbf16>
    %61 = vector.extract_strided_slice %60 {offsets = [0, 0], sizes = [8, 288], strides = [1, 1]} : vector<8x342xbf16> to vector<8x288xbf16>
    %62 = vector.extract_strided_slice %60 {offsets = [0, 1], sizes = [8, 288], strides = [1, 1]} : vector<8x342xbf16> to vector<8x288xbf16>
    %63 = vector.extract_strided_slice %60 {offsets = [0, 2], sizes = [8, 288], strides = [1, 1]} : vector<8x342xbf16> to vector<8x288xbf16>
    %64 = tpu.concatenate %61, %62, %63 in 0 : vector<8x288xbf16>, vector<8x288xbf16>, vector<8x288xbf16> -> vector<24x288xbf16>
    %c0_29 = arith.constant 0 : index
    %c0_30 = arith.constant 0 : index
    %c0_31 = arith.constant 0 : index
    %65 = vector.load %arg9[%c0_29, %c0_30, %c0_31] : memref<3x8x24xbf16, #tpu.memory_space<vmem>>, vector<1x8x24xbf16>
    %66 = vector.shape_cast %65 : vector<1x8x24xbf16> to vector<8x24xbf16>
    %cst_32 = arith.constant dense<0.000000e+00> : vector<8x288xf32>
    %67 = tpu.matmul %66, %64, %cst_32 {dimension_numbers = #tpu.dot_dimension_numbers<[1], [0], [0], [1], [0, 0, 1, 1], [], []>} : vector<8x24xbf16>, vector<24x288xbf16>, vector<8x288xf32> -> vector<8x288xf32>
    %68 = vector.extract_strided_slice %60 {offsets = [0, 18], sizes = [8, 288], strides = [1, 1]} : vector<8x342xbf16> to vector<8x288xbf16>
    %69 = vector.extract_strided_slice %60 {offsets = [0, 19], sizes = [8, 288], strides = [1, 1]} : vector<8x342xbf16> to vector<8x288xbf16>
    %70 = vector.extract_strided_slice %60 {offsets = [0, 20], sizes = [8, 288], strides = [1, 1]} : vector<8x342xbf16> to vector<8x288xbf16>
    %71 = tpu.concatenate %68, %69, %70 in 0 : vector<8x288xbf16>, vector<8x288xbf16>, vector<8x288xbf16> -> vector<24x288xbf16>
    %c1_33 = arith.constant 1 : index
    %c0_34 = arith.constant 0 : index
    %c0_35 = arith.constant 0 : index
    %72 = vector.load %arg9[%c1_33, %c0_34, %c0_35] : memref<3x8x24xbf16, #tpu.memory_space<vmem>>, vector<1x8x24xbf16>
    %73 = vector.shape_cast %72 : vector<1x8x24xbf16> to vector<8x24xbf16>
    %cst_36 = arith.constant dense<0.000000e+00> : vector<8x288xf32>
    %74 = tpu.matmul %73, %71, %cst_36 {dimension_numbers = #tpu.dot_dimension_numbers<[1], [0], [0], [1], [0, 0, 1, 1], [], []>} : vector<8x24xbf16>, vector<24x288xbf16>, vector<8x288xf32> -> vector<8x288xf32>
    %75 = arith.addf %67, %74 : vector<8x288xf32>
    %76 = vector.extract_strided_slice %60 {offsets = [0, 36], sizes = [8, 288], strides = [1, 1]} : vector<8x342xbf16> to vector<8x288xbf16>
    %77 = vector.extract_strided_slice %60 {offsets = [0, 37], sizes = [8, 288], strides = [1, 1]} : vector<8x342xbf16> to vector<8x288xbf16>
    %78 = vector.extract_strided_slice %60 {offsets = [0, 38], sizes = [8, 288], strides = [1, 1]} : vector<8x342xbf16> to vector<8x288xbf16>
    %79 = tpu.concatenate %76, %77, %78 in 0 : vector<8x288xbf16>, vector<8x288xbf16>, vector<8x288xbf16> -> vector<24x288xbf16>
    %c2_37 = arith.constant 2 : index
    %c0_38 = arith.constant 0 : index
    %c0_39 = arith.constant 0 : index
    %80 = vector.load %arg9[%c2_37, %c0_38, %c0_39] : memref<3x8x24xbf16, #tpu.memory_space<vmem>>, vector<1x8x24xbf16>
    %81 = vector.shape_cast %80 : vector<1x8x24xbf16> to vector<8x24xbf16>
    %cst_40 = arith.constant dense<0.000000e+00> : vector<8x288xf32>
    %82 = tpu.matmul %81, %79, %cst_40 {dimension_numbers = #tpu.dot_dimension_numbers<[1], [0], [0], [1], [0, 0, 1, 1], [], []>} : vector<8x24xbf16>, vector<24x288xbf16>, vector<8x288xf32> -> vector<8x288xf32>
    %83 = arith.addf %75, %82 : vector<8x288xf32>
    %c0_41 = arith.constant 0 : index
    %c0_42 = arith.constant 0 : index
    %84 = vector.load %arg10[%c0_41, %c0_42] : memref<8x1xf32, #tpu.memory_space<vmem>>, vector<8x1xf32>
    %85 = vector.broadcast %84 : vector<8x1xf32> to vector<8x288xf32>
    %86 = arith.mulf %83, %85 : vector<8x288xf32>
    %c0_43 = arith.constant 0 : index
    %c0_44 = arith.constant 0 : index
    %87 = vector.load %arg11[%c0_43, %c0_44] : memref<8x1xf32, #tpu.memory_space<vmem>>, vector<8x1xf32>
    %88 = vector.broadcast %87 : vector<8x1xf32> to vector<8x288xf32>
    %89 = arith.addf %86, %88 : vector<8x288xf32>
    %cst_45 = arith.constant 0.000000e+00 : f32
    %90 = vector.broadcast %cst_45 : f32 to vector<8x288xf32>
    %91 = arith.maximumf %89, %90 : vector<8x288xf32>
    %c0_46 = arith.constant 0 : index
    %c0_47 = arith.constant 0 : index
    %c0_48 = arith.constant 0 : index
    %92 = vector.load %arg12[%c0_46, %c0_47, %c0_48] : memref<1x8x288xf32, #tpu.memory_space<vmem>>, vector<1x8x288xf32>
    %93 = vector.shape_cast %92 : vector<1x8x288xf32> to vector<8x288xf32>
    %94 = vector.shape_cast %91 : vector<8x288xf32> to vector<1x8x288xf32>
    tpu.vector_store %arg12[%c0_46, %c0_47, %c0_48], %94 {strides = array<i32>} : memref<1x8x288xf32, #tpu.memory_space<vmem>>, vector<1x8x288xf32>,
    return
  }
  func.func @transform_0(%arg0: i32) -> (i32, i32, i32) {
    %c0_i32 = arith.constant 0 : i32
    %c0_i32_0 = arith.constant 0 : i32
    %c0_i32_1 = arith.constant 0 : i32
    return %arg0, %c0_i32, %c0_i32_0 : i32, i32, i32
  }
  func.func @transform_1(%arg0: i32) -> (i32, i32, i32) {
    %c0_i32 = arith.constant 0 : i32
    %c0_i32_0 = arith.constant 0 : i32
    %c0_i32_1 = arith.constant 0 : i32
    return %arg0, %c0_i32, %c0_i32_0 : i32, i32, i32
  }
  func.func @transform_2(%arg0: i32) -> (i32, i32) {
    %c0_i32 = arith.constant 0 : i32
    %c0_i32_0 = arith.constant 0 : i32
    %c0_i32_1 = arith.constant 0 : i32
    return %c0_i32, %c0_i32_0 : i32, i32
  }
  func.func @transform_3(%arg0: i32) -> (i32, i32) {
    %c0_i32 = arith.constant 0 : i32
    %c0_i32_0 = arith.constant 0 : i32
    %c0_i32_1 = arith.constant 0 : i32
    return %c0_i32, %c0_i32_0 : i32, i32
  }
  func.func @transform_4(%arg0: i32) -> (i32, i32) {
    %c0_i32 = arith.constant 0 : i32
    %c0_i32_0 = arith.constant 0 : i32
    %c0_i32_1 = arith.constant 0 : i32
    return %c0_i32, %c0_i32_0 : i32, i32
  }
  func.func @transform_5(%arg0: i32) -> (i32, i32, i32) {
    %c0_i32 = arith.constant 0 : i32
    %c0_i32_0 = arith.constant 0 : i32
    %c0_i32_1 = arith.constant 0 : i32
    %c0_i32_2 = arith.constant 0 : i32
    return %c0_i32, %c0_i32_0, %c0_i32_1 : i32, i32, i32
  }
  func.func @transform_6(%arg0: i32) -> (i32, i32) {
    %c0_i32 = arith.constant 0 : i32
    %c0_i32_0 = arith.constant 0 : i32
    %c0_i32_1 = arith.constant 0 : i32
    return %c0_i32, %c0_i32_0 : i32, i32
  }
  func.func @transform_7(%arg0: i32) -> (i32, i32) {
    %c0_i32 = arith.constant 0 : i32
    %c0_i32_0 = arith.constant 0 : i32
    %c0_i32_1 = arith.constant 0 : i32
    return %c0_i32, %c0_i32_0 : i32, i32
  }
  func.func @transform_8(%arg0: i32) -> (i32, i32, i32) {
    %c0_i32 = arith.constant 0 : i32
    %c0_i32_0 = arith.constant 0 : i32
    %c0_i32_1 = arith.constant 0 : i32
    %c0_i32_2 = arith.constant 0 : i32
    return %c0_i32, %c0_i32_0, %c0_i32_1 : i32, i32, i32
  }
  func.func @transform_9(%arg0: i32) -> (i32, i32) {
    %c0_i32 = arith.constant 0 : i32
    %c0_i32_0 = arith.constant 0 : i32
    %c0_i32_1 = arith.constant 0 : i32
    return %c0_i32, %c0_i32_0 : i32, i32
  }
  func.func @transform_10(%arg0: i32) -> (i32, i32) {
    %c0_i32 = arith.constant 0 : i32
    %c0_i32_0 = arith.constant 0 : i32
    %c0_i32_1 = arith.constant 0 : i32
    return %c0_i32, %c0_i32_0 : i32, i32
  }
  func.func @transform_11(%arg0: i32) -> (i32, i32, i32) {
    %c0_i32 = arith.constant 0 : i32
    %c0_i32_0 = arith.constant 0 : i32
    %c0_i32_1 = arith.constant 0 : i32
    return %arg0, %c0_i32, %c0_i32_0 : i32, i32, i32
  }
}

</mosaic_0001>

<llo_original>
// kernel: _lambda_.1
$region0: #{_lambda_.1}
  #allocation0 [shape = 'u32[]', space=smem, size = 0x4, offset = 0x4, fixed_abs, tag = 'smem constant byte address 0x4 - core index']
  #allocation1 [shape = 'u32[144,128]{1,0:T(1,128)}', space=vmem, size = 0x12000, scoped, tag = 'internal scratch']
  %s0 = inlined_call_operand.vmem [shape: bf16[2,32,8], index: 0, kind: input, shape index: {}]
  %s1 = inlined_call_operand.vmem [shape: bf16[2,4,342], index: 1, kind: input, shape index: {}]
  %s2 = inlined_call_operand.vmem [shape: bf16[19,8], index: 2, kind: input, shape index: {}]
  %s3 = inlined_call_operand.vmem [shape: bf16[8,18], index: 3, kind: input, shape index: {}]
  %s4 = inlined_call_operand.vmem [shape: f32[1,288], index: 4, kind: input, shape index: {}]
  %s5 = inlined_call_operand.vmem [shape: bf16[3,8,24], index: 5, kind: input, shape index: {}]
  %s6 = inlined_call_operand.vmem [shape: f32[8,1], index: 6, kind: input, shape index: {}]
  %s7 = inlined_call_operand.vmem [shape: f32[8,1], index: 7, kind: input, shape index: {}]
  %s8 = inlined_call_operand.vmem [shape: bf16[3,8,24], index: 8, kind: input, shape index: {}]
  %s9 = inlined_call_operand.vmem [shape: f32[8,1], index: 9, kind: input, shape index: {}]
  %s10 = inlined_call_operand.vmem [shape: f32[8,1], index: 10, kind: input, shape index: {}]
  %s11 = inlined_call_operand.vmem [shape: f32[2,8,288], index: 11, kind: output, shape index: {}]
  %s12 = sld [smem:[#allocation0]]
  $region77: #{_lambda_.1} parent=0
    _
  %s14 = ssub.s32 1, %s12
  %s15 = scalar_select 0, %s14, %s12
  loop: start=0, step=1, limit=4
  $region2: #{_lambda_.1} parent=0 // loop_pre_header
    _
  $region3: #{_lambda_.1} parent=0 // loop_header
    %s17 = sphi 0, %s21
    %p18 = scmp.ge.s32.totalorder %s17, 4
    %s27 = sphi 0, %s29
    %s30 = sphi 0, %s27
    %s31 = sphi 0, %s30
    %s47 = sphi 0, %s31
    %s53 = sphi 0, %s55
    %s56 = sphi 0, %s53
    %s57 = sphi 0, %s56
    %s73 = sphi 0, %s57
    %s77 = sphi 0, %s77
    %s79 = sphi 0, %s77
    %s80 = sphi 0, %s79
    %s94 = sphi 0, %s80
    %s98 = sphi 0, %s98
    %s100 = sphi 0, %s98
    %s101 = sphi 0, %s100
    %s115 = sphi 0, %s101
    %s119 = sphi 0, %s119
    %s121 = sphi 0, %s119
    %s122 = sphi 0, %s121
    %s136 = sphi 0, %s122
    %s140 = sphi 0, %s140
    %s142 = sphi 0, %s140
    %s143 = sphi 0, %s142
    %s157 = sphi 0, %s143
    %s161 = sphi 0, %s161
    %s163 = sphi 0, %s161
    %s164 = sphi 0, %s163
    %s178 = sphi 0, %s164
    %s182 = sphi 0, %s182
    %s184 = sphi 0, %s182
    %s185 = sphi 0, %s184
    %s199 = sphi 0, %s185
    %s203 = sphi 0, %s203
    %s205 = sphi 0, %s203
    %s206 = sphi 0, %s205
    %s220 = sphi 0, %s206
    %s224 = sphi 0, %s224
    %s226 = sphi 0, %s224
    %s227 = sphi 0, %s226
    %s241 = sphi 0, %s227
    %s245 = sphi 0, %s245
    %s247 = sphi 0, %s245
    %s248 = sphi 0, %s247
    %s262 = sphi 0, %s248
    %s268 = sphi 0, %s270
    %s271 = sphi 0, %s268
    %s272 = sphi 0, %s271
    %s288 = sphi 0, %s272
  $region4: #{_lambda_.1} parent=0 // loop_header_branch
    %20 = sbr.rel (%p18) target = $region8
  $region5: #{_lambda_.1} parent=0 // loop_body
    %s22 = ssub.s32 %s17, 1
    %s23 = ssub.s32 %s17, 2
    %s24 = sadd.s32 %s17, 1
    %s25 = ssub.s32 %s17, %s24
    %p26 = scmp.eq.s32.totalorder %s25, 0
    %s28 = sadd.s32 %s27, 1
    %s29 = scalar_select %p26, %s27, %s28
    %p32 = pneg %p26
    %p33 = scmp.eq.s32.totalorder %s17, 1
    %p34 = por %p32, %p33
    %p35 = scmp.ne.s32.totalorder %s27, %s30
    %p36 = scmp.eq.s32.totalorder %s17, 0
    %p37 = por %p35, %p36
    %p38 = scmp.ne.s32.totalorder %s27, %s30
    %p39 = scmp.eq.s32.totalorder %s22, 1
    %p40 = por %p38, %p39
    %p41 = scmp.ne.s32.totalorder %s30, %s31
    %p42 = scmp.eq.s32.totalorder %s22, 0
    %p43 = por %p41, %p42
    %p44 = scmp.ne.s32.totalorder %s30, %s31
    %p45 = scmp.eq.s32.totalorder %s23, 1
    %p46 = por %p44, %p45
    %p48 = scmp.ne.s32.totalorder %s31, %s47
    %p49 = scmp.eq.s32.totalorder %s23, 0
    %p50 = por %p48, %p49
    %s51 = ssub.s32 %s17, %s24
    %p52 = scmp.eq.s32.totalorder %s51, 0
    %s54 = sadd.s32 %s53, 1
    %s55 = scalar_select %p52, %s53, %s54
    %p58 = pneg %p52
    %p59 = scmp.eq.s32.totalorder %s17, 1
    %p60 = por %p58, %p59
    %p61 = scmp.ne.s32.totalorder %s53, %s56
    %p62 = scmp.eq.s32.totalorder %s17, 0
    %p63 = por %p61, %p62
    %p64 = scmp.ne.s32.totalorder %s53, %s56
    %p65 = scmp.eq.s32.totalorder %s22, 1
    %p66 = por %p64, %p65
    %p67 = scmp.ne.s32.totalorder %s56, %s57
    %p68 = scmp.eq.s32.totalorder %s22, 0
    %p69 = por %p67, %p68
    %p70 = scmp.ne.s32.totalorder %s56, %s57
    %p71 = scmp.eq.s32.totalorder %s23, 1
    %p72 = por %p70, %p71
    %p74 = scmp.ne.s32.totalorder %s57, %s73
    %p75 = scmp.eq.s32.totalorder %s23, 0
    %p76 = por %p74, %p75
    %s78 = sadd.s32 %s77, 1
    %p81 = scmp.eq.s32.totalorder %s17, 1
    %p82 = scmp.ne.s32.totalorder %s77, %s79
    %p83 = scmp.eq.s32.totalorder %s17, 0
    %p84 = por %p82, %p83
    %p85 = scmp.ne.s32.totalorder %s77, %s79
    %p86 = scmp.eq.s32.totalorder %s22, 1
    %p87 = por %p85, %p86
    %p88 = scmp.ne.s32.totalorder %s79, %s80
    %p89 = scmp.eq.s32.totalorder %s22, 0
    %p90 = por %p88, %p89
    %p91 = scmp.ne.s32.totalorder %s79, %s80
    %p92 = scmp.eq.s32.totalorder %s23, 1
    %p93 = por %p91, %p92
    %p95 = scmp.ne.s32.totalorder %s80, %s94
    %p96 = scmp.eq.s32.totalorder %s23, 0
    %p97 = por %p95, %p96
    %s99 = sadd.s32 %s98, 1
    %p102 = scmp.eq.s32.totalorder %s17, 1
    %p103 = scmp.ne.s32.totalorder %s98, %s100
    %p104 = scmp.eq.s32.totalorder %s17, 0
    %p105 = por %p103, %p104
    %p106 = scmp.ne.s32.totalorder %s98, %s100
    %p107 = scmp.eq.s32.totalorder %s22, 1
    %p108 = por %p106, %p107
    %p109 = scmp.ne.s32.totalorder %s100, %s101
    %p110 = scmp.eq.s32.totalorder %s22, 0
    %p111 = por %p109, %p110
    %p112 = scmp.ne.s32.totalorder %s100, %s101
    %p113 = scmp.eq.s32.totalorder %s23, 1
    %p114 = por %p112, %p113
    %p116 = scmp.ne.s32.totalorder %s101, %s115
    %p117 = scmp.eq.s32.totalorder %s23, 0
    %p118 = por %p116, %p117
    %s120 = sadd.s32 %s119, 1
    %p123 = scmp.eq.s32.totalorder %s17, 1
    %p124 = scmp.ne.s32.totalorder %s119, %s121
    %p125 = scmp.eq.s32.totalorder %s17, 0
    %p126 = por %p124, %p125
    %p127 = scmp.ne.s32.totalorder %s119, %s121
    %p128 = scmp.eq.s32.totalorder %s22, 1
    %p129 = por %p127, %p128
    %p130 = scmp.ne.s32.totalorder %s121, %s122
    %p131 = scmp.eq.s32.totalorder %s22, 0
    %p132 = por %p130, %p131
    %p133 = scmp.ne.s32.totalorder %s121, %s122
    %p134 = scmp.eq.s32.totalorder %s23, 1
    %p135 = por %p133, %p134
    %p137 = scmp.ne.s32.totalorder %s122, %s136
    %p138 = scmp.eq.s32.totalorder %s23, 0
    %p139 = por %p137, %p138
    %s141 = sadd.s32 %s140, 1
    %p144 = scmp.eq.s32.totalorder %s17, 1
    %p145 = scmp.ne.s32.totalorder %s140, %s142
    %p146 = scmp.eq.s32.totalorder %s17, 0
    %p147 = por %p145, %p146
    %p148 = scmp.ne.s32.totalorder %s140, %s142
    %p149 = scmp.eq.s32.totalorder %s22, 1
    %p150 = por %p148, %p149
    %p151 = scmp.ne.s32.totalorder %s142, %s143
    %p152 = scmp.eq.s32.totalorder %s22, 0
    %p153 = por %p151, %p152
    %p154 = scmp.ne.s32.totalorder %s142, %s143
    %p155 = scmp.eq.s32.totalorder %s23, 1
    %p156 = por %p154, %p155
    %p158 = scmp.ne.s32.totalorder %s143, %s157
    %p159 = scmp.eq.s32.totalorder %s23, 0
    %p160 = por %p158, %p159
    %s162 = sadd.s32 %s161, 1
    %p165 = scmp.eq.s32.totalorder %s17, 1
    %p166 = scmp.ne.s32.totalorder %s161, %s163
    %p167 = scmp.eq.s32.totalorder %s17, 0
    %p168 = por %p166, %p167
    %p169 = scmp.ne.s32.totalorder %s161, %s163
    %p170 = scmp.eq.s32.totalorder %s22, 1
    %p171 = por %p169, %p170
    %p172 = scmp.ne.s32.totalorder %s163, %s164
    %p173 = scmp.eq.s32.totalorder %s22, 0
    %p174 = por %p172, %p173
    %p175 = scmp.ne.s32.totalorder %s163, %s164
    %p176 = scmp.eq.s32.totalorder %s23, 1
    %p177 = por %p175, %p176
    %p179 = scmp.ne.s32.totalorder %s164, %s178
    %p180 = scmp.eq.s32.totalorder %s23, 0
    %p181 = por %p179, %p180
    %s183 = sadd.s32 %s182, 1
    %p186 = scmp.eq.s32.totalorder %s17, 1
    %p187 = scmp.ne.s32.totalorder %s182, %s184
    %p188 = scmp.eq.s32.totalorder %s17, 0
    %p189 = por %p187, %p188
    %p190 = scmp.ne.s32.totalorder %s182, %s184
    %p191 = scmp.eq.s32.totalorder %s22, 1
    %p192 = por %p190, %p191
    %p193 = scmp.ne.s32.totalorder %s184, %s185
    %p194 = scmp.eq.s32.totalorder %s22, 0
    %p195 = por %p193, %p194
    %p196 = scmp.ne.s32.totalorder %s184, %s185
    %p197 = scmp.eq.s32.totalorder %s23, 1
    %p198 = por %p196, %p197
    %p200 = scmp.ne.s32.totalorder %s185, %s199
    %p201 = scmp.eq.s32.totalorder %s23, 0
    %p202 = por %p200, %p201
    %s204 = sadd.s32 %s203, 1
    %p207 = scmp.eq.s32.totalorder %s17, 1
    %p208 = scmp.ne.s32.totalorder %s203, %s205
    %p209 = scmp.eq.s32.totalorder %s17, 0
    %p210 = por %p208, %p209
    %p211 = scmp.ne.s32.totalorder %s203, %s205
    %p212 = scmp.eq.s32.totalorder %s22, 1
    %p213 = por %p211, %p212
    %p214 = scmp.ne.s32.totalorder %s205, %s206
    %p215 = scmp.eq.s32.totalorder %s22, 0
    %p216 = por %p214, %p215
    %p217 = scmp.ne.s32.totalorder %s205, %s206
    %p218 = scmp.eq.s32.totalorder %s23, 1
    %p219 = por %p217, %p218
    %p221 = scmp.ne.s32.totalorder %s206, %s220
    %p222 = scmp.eq.s32.totalorder %s23, 0
    %p223 = por %p221, %p222
    %s225 = sadd.s32 %s224, 1
    %p228 = scmp.eq.s32.totalorder %s17, 1
    %p229 = scmp.ne.s32.totalorder %s224, %s226
    %p230 = scmp.eq.s32.totalorder %s17, 0
    %p231 = por %p229, %p230
    %p232 = scmp.ne.s32.totalorder %s224, %s226
    %p233 = scmp.eq.s32.totalorder %s22, 1
    %p234 = por %p232, %p233
    %p235 = scmp.ne.s32.totalorder %s226, %s227
    %p236 = scmp.eq.s32.totalorder %s22, 0
    %p237 = por %p235, %p236
    %p238 = scmp.ne.s32.totalorder %s226, %s227
    %p239 = scmp.eq.s32.totalorder %s23, 1
    %p240 = por %p238, %p239
    %p242 = scmp.ne.s32.totalorder %s227, %s241
    %p243 = scmp.eq.s32.totalorder %s23, 0
    %p244 = por %p242, %p243
    %s246 = sadd.s32 %s245, 1
    %p249 = scmp.eq.s32.totalorder %s17, 1
    %p250 = scmp.ne.s32.totalorder %s245, %s247
    %p251 = scmp.eq.s32.totalorder %s17, 0
    %p252 = por %p250, %p251
    %p253 = scmp.ne.s32.totalorder %s245, %s247
    %p254 = scmp.eq.s32.totalorder %s22, 1
    %p255 = por %p253, %p254
    %p256 = scmp.ne.s32.totalorder %s247, %s248
    %p257 = scmp.eq.s32.totalorder %s22, 0
    %p258 = por %p256, %p257
    %p259 = scmp.ne.s32.totalorder %s247, %s248
    %p260 = scmp.eq.s32.totalorder %s23, 1
    %p261 = por %p259, %p260
    %p263 = scmp.ne.s32.totalorder %s248, %s262
    %p264 = scmp.eq.s32.totalorder %s23, 0
    %p265 = por %p263, %p264
    %s266 = ssub.s32 %s17, %s24
    %p267 = scmp.eq.s32.totalorder %s266, 0
    %s269 = sadd.s32 %s268, 1
    %s270 = scalar_select %p267, %s268, %s269
    %p273 = pneg %p267
    %p274 = scmp.eq.s32.totalorder %s17, 1
    %p275 = por %p273, %p274
    %p276 = scmp.ne.s32.totalorder %s268, %s271
    %p277 = scmp.eq.s32.totalorder %s17, 0
    %p278 = por %p276, %p277
    %p279 = scmp.ne.s32.totalorder %s268, %s271
    %p280 = scmp.eq.s32.totalorder %s22, 1
    %p281 = por %p279, %p280
    %p282 = scmp.ne.s32.totalorder %s271, %s272
    %p283 = scmp.eq.s32.totalorder %s22, 0
    %p284 = por %p282, %p283
    %p285 = scmp.ne.s32.totalorder %s271, %s272
    %p286 = scmp.eq.s32.totalorder %s23, 1
    %p287 = por %p285, %p286
    %p289 = scmp.ne.s32.totalorder %s272, %s288
    %p290 = scmp.eq.s32.totalorder %s23, 0
    %p291 = por %p289, %p290
    %p292 = scmp.le.s32.totalorder 1, %s17
    %p293 = scmp.lt.s32.totalorder %s17, 3
    %p294 = pnand %p292, %p293
    %p295 = pneg %p294
    // Predicated region
    $region9: #{_lambda_.1} parent=5 // pred_check
      _
    $region10: #{_lambda_.1} parent=5 // pred_check_branch
      %297 = sbr.rel (%p294) target = $region12
    $region11: #{_lambda_.1} parent=5 // pred_region
      %s298 = ssub.s32 %s17, 1
      // Predicated region
      $region13: #{_lambda_.1} parent=11 // pred_check
        %p299 = pneg %p90
      $region14: #{_lambda_.1} parent=11 // pred_check_branch
        %301 = sbr.rel (%p299) target = $region16
      $region15: #{_lambda_.1} parent=11 // pred_region
        _
      $region16: #{_lambda_.1} parent=11 // pred_fallthru
        _
      // Predicated region
      $region17: #{_lambda_.1} parent=11 // pred_check
        %p302 = pneg %p111
      $region18: #{_lambda_.1} parent=11 // pred_check_branch
        %304 = sbr.rel (%p302) target = $region20
      $region19: #{_lambda_.1} parent=11 // pred_region
        _
      $region20: #{_lambda_.1} parent=11 // pred_fallthru
        _
      // Predicated region
      $region21: #{_lambda_.1} parent=11 // pred_check
        %p305 = pneg %p132
      $region22: #{_lambda_.1} parent=11 // pred_check_branch
        %307 = sbr.rel (%p305) target = $region24
      $region23: #{_lambda_.1} parent=11 // pred_region
        _
      $region24: #{_lambda_.1} parent=11 // pred_fallthru
        _
      // Predicated region
      $region25: #{_lambda_.1} parent=11 // pred_check
        %p308 = pneg %p153
      $region26: #{_lambda_.1} parent=11 // pred_check_branch
        %310 = sbr.rel (%p308) target = $region28
      $region27: #{_lambda_.1} parent=11 // pred_region
        _
      $region28: #{_lambda_.1} parent=11 // pred_fallthru
        _
      // Predicated region
      $region29: #{_lambda_.1} parent=11 // pred_check
        %p311 = pneg %p174
      $region30: #{_lambda_.1} parent=11 // pred_check_branch
        %313 = sbr.rel (%p311) target = $region32
      $region31: #{_lambda_.1} parent=11 // pred_region
        _
      $region32: #{_lambda_.1} parent=11 // pred_fallthru
        _
      // Predicated region
      $region33: #{_lambda_.1} parent=11 // pred_check
        %p314 = pneg %p195
      $region34: #{_lambda_.1} parent=11 // pred_check_branch
        %316 = sbr.rel (%p314) target = $region36
      $region35: #{_lambda_.1} parent=11 // pred_region
        _
      $region36: #{_lambda_.1} parent=11 // pred_fallthru
        _
      // Predicated region
      $region37: #{_lambda_.1} parent=11 // pred_check
        %p317 = pneg %p216
      $region38: #{_lambda_.1} parent=11 // pred_check_branch
        %319 = sbr.rel (%p317) target = $region40
      $region39: #{_lambda_.1} parent=11 // pred_region
        _
      $region40: #{_lambda_.1} parent=11 // pred_fallthru
        _
      // Predicated region
      $region41: #{_lambda_.1} parent=11 // pred_check
        %p320 = pneg %p237
      $region42: #{_lambda_.1} parent=11 // pred_check_branch
        %322 = sbr.rel (%p320) target = $region44
      $region43: #{_lambda_.1} parent=11 // pred_region
        _
      $region44: #{_lambda_.1} parent=11 // pred_fallthru
        _
      // Predicated region
      $region45: #{_lambda_.1} parent=11 // pred_check
        %p323 = pneg %p258
      $region46: #{_lambda_.1} parent=11 // pred_check_branch
        %325 = sbr.rel (%p323) target = $region48
      $region47: #{_lambda_.1} parent=11 // pred_region
        _
      $region48: #{_lambda_.1} parent=11 // pred_fallthru
        _
    $region12: #{_lambda_.1} parent=5 // pred_fallthru
      _
    %p326 = scmp.lt.s32.totalorder %s17, 2
    // Predicated region
    $region49: #{_lambda_.1} parent=5 // pred_check
      %p327 = pneg %p326
    $region50: #{_lambda_.1} parent=5 // pred_check_branch
      %329 = sbr.rel (%p327) target = $region52
    $region51: #{_lambda_.1} parent=5 // pred_region
      // Predicated region
      $region53: #{_lambda_.1} parent=51 // pred_check
        %p330 = pneg %p37
      $region54: #{_lambda_.1} parent=51 // pred_check_branch
        %332 = sbr.rel (%p330) target = $region56
      $region55: #{_lambda_.1} parent=51 // pred_region
        %p333 = scmp.lt.s32.totalorder %s17, 1
        %s334 = scalar_select %p333, %s17, 1
        %s335 = smul.addr %s334, 4
        %s336 = smul.addr %s335, 4
        %s337 = scalar_lea.vmem %s0, %s336
      $region56: #{_lambda_.1} parent=51 // pred_fallthru
        _
      // Predicated region
      $region57: #{_lambda_.1} parent=51 // pred_check
        %p338 = pneg %p63
      $region58: #{_lambda_.1} parent=51 // pred_check_branch
        %340 = sbr.rel (%p338) target = $region60
      $region59: #{_lambda_.1} parent=51 // pred_region
        %p341 = scmp.lt.s32.totalorder %s17, 1
        %s342 = scalar_select %p341, %s17, 1
        %s343 = smul.addr %s342, 3
        %s344 = smul.addr %s343, 2
        %s345 = scalar_lea.vmem %s1, %s344
      $region60: #{_lambda_.1} parent=51 // pred_fallthru
        _
    $region52: #{_lambda_.1} parent=5 // pred_fallthru
      _
    %p346 = scmp.le.s32.totalorder 1, %s17
    %p347 = scmp.lt.s32.totalorder %s17, 3
    %p348 = pnand %p346, %p347
    %p349 = pneg %p348
    // Predicated region
    $region61: #{_lambda_.1} parent=5 // pred_check
      _
    $region62: #{_lambda_.1} parent=5 // pred_check_branch
      %351 = sbr.rel (%p348) target = $region64
    $region63: #{_lambda_.1} parent=5 // pred_region
      %s352 = ssub.s32 %s17, 1
      %p353 = scmp.lt.s32.totalorder %s22, 1
      %s354 = scalar_select %p353, %s22, 1
      %s355 = smul.addr %s354, 4
      %s356 = smul.addr %s355, 4
      %s357 = scalar_lea.vmem %s0, %s356
      %p358 = pneg %p43
      %p359 = pneg %p40
      %p360 = scmp.lt.s32.totalorder %s22, 1
      %s361 = scalar_select %p360, %s22, 1
      %s362 = smul.addr %s361, 3
      %s363 = smul.addr %s362, 2
      %s364 = scalar_lea.vmem %s1, %s363
      %p365 = pneg %p69
      %p366 = pneg %p66
      %p367 = pneg %p90
      %p368 = pneg %p87
      %p369 = pneg %p111
      %p370 = pneg %p108
      %p371 = pneg %p132
      %p372 = pneg %p129
      %p373 = pneg %p153
      %p374 = pneg %p150
      %p375 = pneg %p174
      %p376 = pneg %p171
      %p377 = pneg %p195
      %p378 = pneg %p192
      %p379 = pneg %p216
      %p380 = pneg %p213
      %p381 = pneg %p237
      %p382 = pneg %p234
      %p383 = pneg %p258
      %p384 = pneg %p255
      %p385 = pneg %p284
      %p386 = pneg %p281
      %p387 = scmp.lt.s32.totalorder %s22, 1
      %s388 = scalar_select %p387, %s22, 1
      %s389 = smul.addr %s388, 3
      %s390 = smul.addr %s389, 8
      %s391 = scalar_lea.vmem %s11, %s390
      %p392 = scmp.lt.s32.totalorder %s22, 1
      %s393 = scalar_select %p392, %s22, 1
      %s394 = smul.addr %s393, 4
      %s395 = smul.addr %s394, 4
      %s396 = scalar_lea.vmem %s0, %s395
      %p397 = scmp.lt.s32.totalorder %s22, 1
      %s398 = scalar_select %p397, %s22, 1
      %s399 = smul.addr %s398, 3
      %s400 = smul.addr %s399, 2
      %s401 = scalar_lea.vmem %s1, %s400
      %p402 = scmp.lt.s32.totalorder %s22, 1
      %s403 = scalar_select %p402, %s22, 1
      %s404 = smul.addr %s403, 3
      %s405 = smul.addr %s404, 8
      %s406 = scalar_lea.vmem %s11, %s405
      %v408 = vld [vmem:[%s396] sm:$0xf]
      %v409 = vld [vmem:[%s396 + $0x4] sm:$0xf]
      %v410 = vld [vmem:[%s396 + $0x8] sm:$0xf]
      %v411 = vld [vmem:[%s396 + $0xc] sm:$0xf]
      %v412 = vld [vmem:[%s3] sm:$0xf]
      %v417 = vunpack.c.l.b16 %v408
      %v418 = vunpack.c.l.b16 %v409
      %v419 = vunpack.c.l.b16 %v410
      %v420 = vunpack.c.l.b16 %v411
      %v421 = vpack.c.b16 %v418, %v417
      %v422 = vpack.c.b16 %v420, %v419
      %vm423 = vcmask 64512
      %v425 = vsel %vm423, %v421, 0
      %v428 = vsel %vm423, %v422, 0
      %vm430 = vcmask 1043456
      %v432 = vsel %vm430, %v412, 0
      %434 = vmatprep.subr.bf16.mxu0 0
      %435 = vmatpush1.bf16.msra.mxu0 %v432
      %436 = vmatprep.subr.bf16.mxu0 0
      %437 = vmatpush1.bf16.msra.mxu0 0
      %438 = vmatprep.subr.bf16.mxu0 0
      %439 = vmatpush1.bf16.msra.mxu0 0
      %440 = vmatprep.subr.bf16.mxu0 0
      %441 = vmatpush1.bf16.msra.mxu0 0
      %442 = vmatprep.subr.bf16.mxu0 0
      %443 = vmatpush1.bf16.msra.mxu0 0
      %444 = vmatprep.subr.bf16.mxu0 0
      %445 = vmatpush1.bf16.msra.mxu0 0
      %446 = vmatprep.subr.bf16.mxu0 0
      %447 = vmatpush1.bf16.msra.mxu0 0
      %448 = vmatprep.subr.bf16.mxu0 0
      %449 = vmatpush1.bf16.msra.mxu0 0
      %450 = vmatprep.subr.bf16.mxu0 0
      %451 = vmatpush1.bf16.msra.mxu0 0
      %452 = vmatprep.subr.bf16.mxu0 0
      %453 = vmatpush1.bf16.msra.mxu0 0
      %454 = vmatprep.subr.bf16.mxu0 0
      %455 = vmatpush1.bf16.msra.mxu0 0
      %456 = vmatprep.subr.bf16.mxu0 0
      %457 = vmatpush1.bf16.msra.mxu0 0
      %458 = vmatprep.subr.bf16.mxu0 0
      %459 = vmatpush1.bf16.msra.mxu0 0
      %460 = vmatprep.subr.bf16.mxu0 0
      %461 = vmatpush1.bf16.msra.mxu0 0
      %462 = vmatprep.subr.bf16.mxu0 0
      %463 = vmatpush1.bf16.msra.mxu0 0
      %464 = vmatprep.subr.bf16.mxu0 0
      %465 = vmatpush1.bf16.msra.mxu0 0
      %466 = vmatprep.mubr.bf16.mxu0 0
      %467 = vmatmul.mubr.bf16.gmra.mrb[0].mxu0 %v425
      %v468 = vpop.f32.mrb[0].mxu0
      %v469 = vadd.f32 0.0, %v468
      %v470 = vpop.f32.mrb[0].mxu0
      %v471 = vpop.f32.mrb[0].mxu0
      %v472 = vadd.f32 0.0, %v471
      %v473 = vpop.f32.mrb[0].mxu0
      %474 = vmatprep.mubr.bf16.mxu0 0
      %475 = vmatmul.mubr.bf16.gmra.mrb[0].mxu0 %v428
      %v476 = vpop.f32.mrb[0].mxu0
      %v477 = vadd.f32 0.0, %v476
      %v478 = vpop.f32.mrb[0].mxu0
      %v479 = vpop.f32.mrb[0].mxu0
      %v480 = vadd.f32 0.0, %v479
      %v481 = vpop.f32.mrb[0].mxu0
      %482 = vdwg.mxu0
      %v483 = vpack.c.bf16 %v469, %v469
      %v484 = vpack.c.bf16 %v472, %v472
      %v485 = vpack.c.bf16 %v477, %v477
      %v486 = vpack.c.bf16 %v480, %v480
      %v487 = vld [vmem:[%s2] sm:$0xf]
      %v488 = vld [vmem:[%s2 + $0x4] sm:$0xf]
      %v489 = vld [vmem:[%s2 + $0x8] sm:$0x3]
      %v493 = vunpack.c.l.b16 %v487
      %v494 = vunpack.c.l.b16 %v488
      %v495 = vunpack.c.l.b16 %v489
      %v496 = vpack.c.b16 %v494, %v493
      %v497 = vpack.c.b16 %v495, %v495
      %v499 = vsel %vm423, %v496, 0
      %v502 = vsel %vm423, %v497, 0
      %v505 = vsel %vm430, %v483, 0
      %507 = vmatprep.subr.bf16.mxu0 0
      %508 = vmatpush1.bf16.msra.mxu0 %v505
      %509 = vmatprep.subr.bf16.mxu0 0
      %510 = vmatpush1.bf16.msra.mxu0 0
      %511 = vmatprep.subr.bf16.mxu0 0
      %512 = vmatpush1.bf16.msra.mxu0 0
      %513 = vmatprep.subr.bf16.mxu0 0
      %514 = vmatpush1.bf16.msra.mxu0 0
      %515 = vmatprep.subr.bf16.mxu0 0
      %516 = vmatpush1.bf16.msra.mxu0 0
      %517 = vmatprep.subr.bf16.mxu0 0
      %518 = vmatpush1.bf16.msra.mxu0 0
      %519 = vmatprep.subr.bf16.mxu0 0
      %520 = vmatpush1.bf16.msra.mxu0 0
      %521 = vmatprep.subr.bf16.mxu0 0
      %522 = vmatpush1.bf16.msra.mxu0 0
      %523 = vmatprep.subr.bf16.mxu0 0
      %524 = vmatpush1.bf16.msra.mxu0 0
      %525 = vmatprep.subr.bf16.mxu0 0
      %526 = vmatpush1.bf16.msra.mxu0 0
      %527 = vmatprep.subr.bf16.mxu0 0
      %528 = vmatpush1.bf16.msra.mxu0 0
      %529 = vmatprep.subr.bf16.mxu0 0
      %530 = vmatpush1.bf16.msra.mxu0 0
      %531 = vmatprep.subr.bf16.mxu0 0
      %532 = vmatpush1.bf16.msra.mxu0 0
      %533 = vmatprep.subr.bf16.mxu0 0
      %534 = vmatpush1.bf16.msra.mxu0 0
      %535 = vmatprep.subr.bf16.mxu0 0
      %536 = vmatpush1.bf16.msra.mxu0 0
      %537 = vmatprep.subr.bf16.mxu0 0
      %538 = vmatpush1.bf16.msra.mxu0 0
      %539 = vmatprep.mubr.bf16.mxu0 0
      %540 = vmatmul.mubr.bf16.gmra.mrb[0].mxu0 %v499
      %v541 = vpop.f32.mrb[0].mxu0
      %v542 = vadd.f32 0.0, %v541
      %v543 = vpop.f32.mrb[0].mxu0
      %v544 = vpop.f32.mrb[0].mxu0
      %v545 = vadd.f32 0.0, %v544
      %v546 = vpop.f32.mrb[0].mxu0
      %547 = vmatprep.mubr.bf16.mxu0 0
      %548 = vmatmul.mubr.bf16.gmra.mrb[0].mxu0 %v502
      %v549 = vpop.f32.mrb[0].mxu0
      %v550 = vadd.f32 0.0, %v549
      %v551 = vpop.f32.mrb[0].mxu0
      %v552 = vpop.f32.mrb[0].mxu0
      %v553 = vpop.f32.mrb[0].mxu0
      %554 = vdwg.mxu0
      %v556 = vsel %vm430, %v484, 0
      %558 = vmatprep.subr.bf16.mxu0 0
      %559 = vmatpush1.bf16.msra.mxu0 %v556
      %560 = vmatprep.subr.bf16.mxu0 0
      %561 = vmatpush1.bf16.msra.mxu0 0
      %562 = vmatprep.subr.bf16.mxu0 0
      %563 = vmatpush1.bf16.msra.mxu0 0
      %564 = vmatprep.subr.bf16.mxu0 0
      %565 = vmatpush1.bf16.msra.mxu0 0
      %566 = vmatprep.subr.bf16.mxu0 0
      %567 = vmatpush1.bf16.msra.mxu0 0
      %568 = vmatprep.subr.bf16.mxu0 0
      %569 = vmatpush1.bf16.msra.mxu0 0
      %570 = vmatprep.subr.bf16.mxu0 0
      %571 = vmatpush1.bf16.msra.mxu0 0
      %572 = vmatprep.subr.bf16.mxu0 0
      %573 = vmatpush1.bf16.msra.mxu0 0
      %574 = vmatprep.subr.bf16.mxu0 0
      %575 = vmatpush1.bf16.msra.mxu0 0
      %576 = vmatprep.subr.bf16.mxu0 0
      %577 = vmatpush1.bf16.msra.mxu0 0
      %578 = vmatprep.subr.bf16.mxu0 0
      %579 = vmatpush1.bf16.msra.mxu0 0
      %580 = vmatprep.subr.bf16.mxu0 0
      %581 = vmatpush1.bf16.msra.mxu0 0
      %582 = vmatprep.subr.bf16.mxu0 0
      %583 = vmatpush1.bf16.msra.mxu0 0
      %584 = vmatprep.subr.bf16.mxu0 0
      %585 = vmatpush1.bf16.msra.mxu0 0
      %586 = vmatprep.subr.bf16.mxu0 0
      %587 = vmatpush1.bf16.msra.mxu0 0
      %588 = vmatprep.subr.bf16.mxu0 0
      %589 = vmatpush1.bf16.msra.mxu0 0
      %590 = vmatprep.mubr.bf16.mxu0 0
      %591 = vmatmul.mubr.bf16.gmra.mrb[0].mxu0 %v499
      %v592 = vpop.f32.mrb[0].mxu0
      %v593 = vadd.f32 0.0, %v592
      %v594 = vpop.f32.mrb[0].mxu0
      %v595 = vpop.f32.mrb[0].mxu0
      %v596 = vadd.f32 0.0, %v595
      %v597 = vpop.f32.mrb[0].mxu0
      %598 = vmatprep.mubr.bf16.mxu0 0
      %599 = vmatmul.mubr.bf16.gmra.mrb[0].mxu0 %v502
      %v600 = vpop.f32.mrb[0].mxu0
      %v601 = vadd.f32 0.0, %v600
      %v602 = vpop.f32.mrb[0].mxu0
      %v603 = vpop.f32.mrb[0].mxu0
      %v604 = vpop.f32.mrb[0].mxu0
      %605 = vdwg.mxu0
      %v607 = vsel %vm430, %v485, 0
      %609 = vmatprep.subr.bf16.mxu0 0
      %610 = vmatpush1.bf16.msra.mxu0 %v607
      %611 = vmatprep.subr.bf16.mxu0 0
      %612 = vmatpush1.bf16.msra.mxu0 0
      %613 = vmatprep.subr.bf16.mxu0 0
      %614 = vmatpush1.bf16.msra.mxu0 0
      %615 = vmatprep.subr.bf16.mxu0 0
      %616 = vmatpush1.bf16.msra.mxu0 0
      %617 = vmatprep.subr.bf16.mxu0 0
      %618 = vmatpush1.bf16.msra.mxu0 0
      %619 = vmatprep.subr.bf16.mxu0 0
      %620 = vmatpush1.bf16.msra.mxu0 0
      %621 = vmatprep.subr.bf16.mxu0 0
      %622 = vmatpush1.bf16.msra.mxu0 0
      %623 = vmatprep.subr.bf16.mxu0 0
      %624 = vmatpush1.bf16.msra.mxu0 0
      %625 = vmatprep.subr.bf16.mxu0 0
      %626 = vmatpush1.bf16.msra.mxu0 0
      %627 = vmatprep.subr.bf16.mxu0 0
      %628 = vmatpush1.bf16.msra.mxu0 0
      %629 = vmatprep.subr.bf16.mxu0 0
      %630 = vmatpush1.bf16.msra.mxu0 0
      %631 = vmatprep.subr.bf16.mxu0 0
      %632 = vmatpush1.bf16.msra.mxu0 0
      %633 = vmatprep.subr.bf16.mxu0 0
      %634 = vmatpush1.bf16.msra.mxu0 0
      %635 = vmatprep.subr.bf16.mxu0 0
      %636 = vmatpush1.bf16.msra.mxu0 0
      %637 = vmatprep.subr.bf16.mxu0 0
      %638 = vmatpush1.bf16.msra.mxu0 0
      %639 = vmatprep.subr.bf16.mxu0 0
      %640 = vmatpush1.bf16.msra.mxu0 0
      %641 = vmatprep.mubr.bf16.mxu0 0
      %642 = vmatmul.mubr.bf16.gmra.mrb[0].mxu0 %v499
      %v643 = vpop.f32.mrb[0].mxu0
      %v644 = vadd.f32 0.0, %v643
      %v645 = vpop.f32.mrb[0].mxu0
      %v646 = vpop.f32.mrb[0].mxu0
      %v647 = vadd.f32 0.0, %v646
      %v648 = vpop.f32.mrb[0].mxu0
      %649 = vmatprep.mubr.bf16.mxu0 0
      %650 = vmatmul.mubr.bf16.gmra.mrb[0].mxu0 %v502
      %v651 = vpop.f32.mrb[0].mxu0
      %v652 = vadd.f32 0.0, %v651
      %v653 = vpop.f32.mrb[0].mxu0
      %v654 = vpop.f32.mrb[0].mxu0
      %v655 = vpop.f32.mrb[0].mxu0
      %656 = vdwg.mxu0
      %v658 = vsel %vm430, %v486, 0
      %660 = vmatprep.subr.bf16.mxu0 0
      %661 = vmatpush1.bf16.msra.mxu0 %v658
      %662 = vmatprep.subr.bf16.mxu0 0
      %663 = vmatpush1.bf16.msra.mxu0 0
      %664 = vmatprep.subr.bf16.mxu0 0
      %665 = vmatpush1.bf16.msra.mxu0 0
      %666 = vmatprep.subr.bf16.mxu0 0
      %667 = vmatpush1.bf16.msra.mxu0 0
      %668 = vmatprep.subr.bf16.mxu0 0
      %669 = vmatpush1.bf16.msra.mxu0 0
      %670 = vmatprep.subr.bf16.mxu0 0
      %671 = vmatpush1.bf16.msra.mxu0 0
      %672 = vmatprep.subr.bf16.mxu0 0
      %673 = vmatpush1.bf16.msra.mxu0 0
      %674 = vmatprep.subr.bf16.mxu0 0
      %675 = vmatpush1.bf16.msra.mxu0 0
      %676 = vmatprep.subr.bf16.mxu0 0
      %677 = vmatpush1.bf16.msra.mxu0 0
      %678 = vmatprep.subr.bf16.mxu0 0
      %679 = vmatpush1.bf16.msra.mxu0 0
      %680 = vmatprep.subr.bf16.mxu0 0
      %681 = vmatpush1.bf16.msra.mxu0 0
      %682 = vmatprep.subr.bf16.mxu0 0
      %683 = vmatpush1.bf16.msra.mxu0 0
      %684 = vmatprep.subr.bf16.mxu0 0
      %685 = vmatpush1.bf16.msra.mxu0 0
      %686 = vmatprep.subr.bf16.mxu0 0
      %687 = vmatpush1.bf16.msra.mxu0 0
      %688 = vmatprep.subr.bf16.mxu0 0
      %689 = vmatpush1.bf16.msra.mxu0 0
      %690 = vmatprep.subr.bf16.mxu0 0
      %691 = vmatpush1.bf16.msra.mxu0 0
      %692 = vmatprep.mubr.bf16.mxu0 0
      %693 = vmatmul.mubr.bf16.gmra.mrb[0].mxu0 %v499
      %v694 = vpop.f32.mrb[0].mxu0
      %v695 = vadd.f32 0.0, %v694
      %v696 = vpop.f32.mrb[0].mxu0
      %v697 = vpop.f32.mrb[0].mxu0
      %v698 = vadd.f32 0.0, %v697
      %v699 = vpop.f32.mrb[0].mxu0
      %700 = vmatprep.mubr.bf16.mxu0 0
      %701 = vmatmul.mubr.bf16.gmra.mrb[0].mxu0 %v502
      %v702 = vpop.f32.mrb[0].mxu0
      %v703 = vadd.f32 0.0, %v702
      %v704 = vpop.f32.mrb[0].mxu0
      %v705 = vpop.f32.mrb[0].mxu0
      %v706 = vpop.f32.mrb[0].mxu0
      %707 = vdwg.mxu0
      %v708 = vcombine.low %v542, %v644
      %v709 = vcombine.high %v542, %v644
      %v711 = vunpack.c.l.s4 1983009808
      %v712 = vunpack.c.0.s8 %v711
      %v713 = vlaneseq
      %v714 = vshrl.u32 %v713, 7
      %v715 = vsub.s32 %v712, %v714
      %v716 = vrot.slane %v708, %v715
      %v718 = vunpack.c.l.s4 1983009808
      %v719 = vunpack.c.0.s8 %v718
      %v720 = vlaneseq
      %v721 = vshrl.u32 %v720, 7
      %v722 = vsub.s32 %v719, %v721
      %v723 = vrot.slane %v709, %v722
      %v724 = vcombine.low %v593, %v695
      %v725 = vcombine.high %v593, %v695
      %v727 = vunpack.c.l.s4 1983009808
      %v728 = vunpack.c.0.s8 %v727
      %v729 = vlaneseq
      %v730 = vshrl.u32 %v729, 7
      %v731 = vsub.s32 %v728, %v730
      %v732 = vrot.slane %v724, %v731
      %v734 = vunpack.c.l.s4 1983009808
      %v735 = vunpack.c.0.s8 %v734
      %v736 = vlaneseq
      %v737 = vshrl.u32 %v736, 7
      %v738 = vsub.s32 %v735, %v737
      %v739 = vrot.slane %v725, %v738
      %v740 = vcombine.low %v716, %v732
      %v741 = vcombine.high %v716, %v732
      %v743 = vunpack.c.l.s4 1934713408
      %v744 = vunpack.c.0.s8 %v743
      %v745 = vlaneseq
      %v746 = vshrl.u32 %v745, 7
      %v747 = vsub.s32 %v744, %v746
      %v748 = vrot.slane %v740, %v747
      %v750 = vunpack.c.l.s4 1934713408
      %v751 = vunpack.c.0.s8 %v750
      %v752 = vlaneseq
      %v753 = vshrl.u32 %v752, 7
      %v754 = vsub.s32 %v751, %v753
      %v755 = vrot.slane %v741, %v754
      %v756 = vcombine.low %v723, %v739
      %v757 = vcombine.high %v723, %v739
      %v759 = vunpack.c.l.s4 1934713408
      %v760 = vunpack.c.0.s8 %v759
      %v761 = vlaneseq
      %v762 = vshrl.u32 %v761, 7
      %v763 = vsub.s32 %v760, %v762
      %v764 = vrot.slane %v756, %v763
      %v766 = vunpack.c.l.s4 1934713408
      %v767 = vunpack.c.0.s8 %v766
      %v768 = vlaneseq
      %v769 = vshrl.u32 %v768, 7
      %v770 = vsub.s32 %v767, %v769
      %v771 = vrot.slane %v757, %v770
      %v772 = vcombine.high %v748, 0.0
      %v773 = vcombine.high %v755, 0.0
      %v774 = vcombine.high %v764, 0.0
      %v775 = vcombine.high %v771, 0.0
      %v776 = vcombine.low %v545, %v647
      %v777 = vcombine.high %v545, %v647
      %v779 = vunpack.c.l.s4 1983009808
      %v780 = vunpack.c.0.s8 %v779
      %v781 = vlaneseq
      %v782 = vshrl.u32 %v781, 7
      %v783 = vsub.s32 %v780, %v782
      %v784 = vrot.slane %v776, %v783
      %v786 = vunpack.c.l.s4 1983009808
      %v787 = vunpack.c.0.s8 %v786
      %v788 = vlaneseq
      %v789 = vshrl.u32 %v788, 7
      %v790 = vsub.s32 %v787, %v789
      %v791 = vrot.slane %v777, %v790
      %v792 = vcombine.low %v596, %v698
      %v793 = vcombine.high %v596, %v698
      %v795 = vunpack.c.l.s4 1983009808
      %v796 = vunpack.c.0.s8 %v795
      %v797 = vlaneseq
      %v798 = vshrl.u32 %v797, 7
      %v799 = vsub.s32 %v796, %v798
      %v800 = vrot.slane %v792, %v799
      %v802 = vunpack.c.l.s4 1983009808
      %v803 = vunpack.c.0.s8 %v802
      %v804 = vlaneseq
      %v805 = vshrl.u32 %v804, 7
      %v806 = vsub.s32 %v803, %v805
      %v807 = vrot.slane %v793, %v806
      %v808 = vcombine.low %v784, %v800
      %v809 = vcombine.high %v784, %v800
      %v811 = vunpack.c.l.s4 1934713408
      %v812 = vunpack.c.0.s8 %v811
      %v813 = vlaneseq
      %v814 = vshrl.u32 %v813, 7
      %v815 = vsub.s32 %v812, %v814
      %v816 = vrot.slane %v808, %v815
      %v818 = vunpack.c.l.s4 1934713408
      %v819 = vunpack.c.0.s8 %v818
      %v820 = vlaneseq
      %v821 = vshrl.u32 %v820, 7
      %v822 = vsub.s32 %v819, %v821
      %v823 = vrot.slane %v809, %v822
      %v824 = vcombine.low %v791, %v807
      %v825 = vcombine.high %v791, %v807
      %v827 = vunpack.c.l.s4 1934713408
      %v828 = vunpack.c.0.s8 %v827
      %v829 = vlaneseq
      %v830 = vshrl.u32 %v829, 7
      %v831 = vsub.s32 %v828, %v830
      %v832 = vrot.slane %v824, %v831
      %v834 = vunpack.c.l.s4 1934713408
      %v835 = vunpack.c.0.s8 %v834
      %v836 = vlaneseq
      %v837 = vshrl.u32 %v836, 7
      %v838 = vsub.s32 %v835, %v837
      %v839 = vrot.slane %v825, %v838
      %v840 = vcombine.high %v816, 0.0
      %v841 = vcombine.high %v823, 0.0
      %v842 = vcombine.high %v832, 0.0
      %v843 = vcombine.high %v839, 0.0
      %v844 = vcombine.low %v550, %v652
      %v846 = vunpack.c.l.s4 1983009808
      %v847 = vunpack.c.0.s8 %v846
      %v848 = vlaneseq
      %v849 = vshrl.u32 %v848, 7
      %v850 = vsub.s32 %v847, %v849
      %v851 = vrot.slane %v844, %v850
      %v852 = vcombine.low %v601, %v703
      %v854 = vunpack.c.l.s4 1983009808
      %v855 = vunpack.c.0.s8 %v854
      %v856 = vlaneseq
      %v857 = vshrl.u32 %v856, 7
      %v858 = vsub.s32 %v855, %v857
      %v859 = vrot.slane %v852, %v858
      %v860 = vcombine.low %v851, %v859
      %v861 = vcombine.high %v851, %v859
      %v863 = vunpack.c.l.s4 1934713408
      %v864 = vunpack.c.0.s8 %v863
      %v865 = vlaneseq
      %v866 = vshrl.u32 %v865, 7
      %v867 = vsub.s32 %v864, %v866
      %v868 = vrot.slane %v860, %v867
      %v869 = vcombine.high %v868, 0.0
      %v871 = vunpack.c.l.s4 1934713408
      %v872 = vunpack.c.0.s8 %v871
      %v873 = vlaneseq
      %v874 = vshrl.u32 %v873, 7
      %v875 = vsub.s32 %v872, %v874
      %v876 = vrot.slane %v861, %v875
      %878 = vrot.lane.b32.xlu0 %v772, 18
      %v879 = vpop.permute.xlu0 %878
      %882 = vrot.lane.b32.xlu0 %v755, 36
      %v883 = vpop.permute.xlu0 %882
      %886 = vrot.lane.b32.xlu0 %v773, 54
      %v887 = vpop.permute.xlu0 %886
      %890 = vrot.lane.b32.xlu0 %v764, 72
      %v891 = vpop.permute.xlu0 %890
      %894 = vrot.lane.b32.xlu0 %v774, 90
      %v895 = vpop.permute.xlu0 %894
      %898 = vrot.lane.b32.xlu0 %v771, 108
      %v899 = vpop.permute.xlu0 %898
      %902 = vrot.lane.b32.xlu0 %v775, 126
      %v903 = vpop.permute.xlu0 %902
      %906 = vrot.lane.b32.xlu0 %v816, 16
      %v907 = vpop.permute.xlu0 %906
      %910 = vrot.lane.b32.xlu0 %v840, 34
      %v911 = vpop.permute.xlu0 %910
      %914 = vrot.lane.b32.xlu0 %v823, 52
      %v915 = vpop.permute.xlu0 %914
      %918 = vrot.lane.b32.xlu0 %v841, 70
      %v919 = vpop.permute.xlu0 %918
      %922 = vrot.lane.b32.xlu0 %v832, 88
      %v923 = vpop.permute.xlu0 %922
      %926 = vrot.lane.b32.xlu0 %v842, 106
      %v927 = vpop.permute.xlu0 %926
      %930 = vrot.lane.b32.xlu0 %v839, 124
      %v931 = vpop.permute.xlu0 %930
      %934 = vrot.lane.b32.xlu0 %v843, 14
      %v935 = vpop.permute.xlu0 %934
      %938 = vrot.lane.b32.xlu0 %v868, 32
      %v939 = vpop.permute.xlu0 %938
      %942 = vrot.lane.b32.xlu0 %v869, 50
      %v943 = vpop.permute.xlu0 %942
      %946 = vrot.lane.b32.xlu0 %v876, 68
      %v947 = vpop.permute.xlu0 %946
      %vm949 = vcmask 146432
      %v950 = vsel %vm949, %v748, %v879
      %vm951 = vcmask 293888
      %v952 = vsel %vm951, %v950, %v883
      %vm953 = vcmask 441344
      %v954 = vsel %vm953, %v952, %v887
      %vm955 = vcmask 588800
      %v956 = vsel %vm955, %v954, %v891
      %vm957 = vcmask 736256
      %v958 = vsel %vm957, %v956, %v895
      %vm959 = vcmask 883712
      %v960 = vsel %vm959, %v958, %v899
      %vm961 = vcmask 1031168
      %v962 = vsel %vm961, %v960, %v903
      %vm963 = vcmask 130048
      %v964 = vsel %vm963, %v903, %v907
      %vm965 = vcmask 277504
      %v966 = vsel %vm965, %v964, %v911
      %vm967 = vcmask 424960
      %v968 = vsel %vm967, %v966, %v915
      %vm969 = vcmask 572416
      %v970 = vsel %vm969, %v968, %v919
      %vm971 = vcmask 719872
      %v972 = vsel %vm971, %v970, %v923
      %vm973 = vcmask 867328
      %v974 = vsel %vm973, %v972, %v927
      %vm975 = vcmask 1014784
      %v976 = vsel %vm975, %v974, %v931
      %vm977 = vcmask 113664
      %v978 = vsel %vm977, %v931, %v935
      %vm979 = vcmask 261120
      %v980 = vsel %vm979, %v978, %v939
      %vm981 = vcmask 408576
      %v982 = vsel %vm981, %v980, %v943
      %vm983 = vcmask 556032
      %v984 = vsel %vm983, %v982, %v947
      %v985 = vpack.c.bf16 %v962, %v962
      %v986 = vpack.c.bf16 %v976, %v976
      %v987 = vpack.c.bf16 %v984, %v984
      %v988 = vld [vmem:[%s401] sm:$0x3f]
      %v990 = vcombine.high %v988, %v988
      %v992 = vunpack.c.l.s4 1983009808
      %v993 = vunpack.c.0.s8 %v992
      %v994 = vlaneseq
      %v995 = vshrl.u32 %v994, 7
      %v996 = vsub.s32 %v993, %v995
      %v997 = vrot.slane %v988, %v996
      %v999 = vunpack.c.l.s4 1983009808
      %v1000 = vunpack.c.0.s8 %v999
      %v1001 = vlaneseq
      %v1002 = vshrl.u32 %v1001, 7
      %v1003 = vsub.s32 %v1000, %v1002
      %v1004 = vrot.slane %v990, %v1003
      %v1005 = vcombine.high %v997, %v997
      %v1009 = vrot.slane %v985, 6
      %v1010 = vrot.slane %v986, 6
      %v1011 = vrot.slane %v987, 6
      %v1012 = vcombine.low %v997, %v997
      %v1013 = vcombine.low %v1004, %v1004
      %1014 = vrot.lane.b32.xlu0 %v1012, 127
      %v1015 = vpop.permute.xlu0 %1014
      %1016 = vrot.lane.b32.xlu0 %v997, 127
      %v1017 = vpop.permute.xlu0 %1016
      %1018 = vrot.lane.b32.xlu0 %v1013, 127
      %v1019 = vpop.permute.xlu0 %1018
      %vm1020 = vcmask 1039360
      %v1021 = vsel %vm1020, %v1015, %v1017
      %v1022 = vsel %vm1020, %v1017, %v1019
      %v1023 = vrot.slane %v985, 2
      %v1024 = vrot.slane %v986, 2
      %v1025 = vrot.slane %v987, 2
      %1026 = vrot.lane.b32.xlu0 %v1023, 127
      %v1027 = vpop.permute.xlu0 %1026
      %1028 = vrot.lane.b32.xlu0 %v1024, 127
      %v1029 = vpop.permute.xlu0 %1028
      %1030 = vrot.lane.b32.xlu0 %v1025, 127
      %v1031 = vpop.permute.xlu0 %1030
      %v1032 = vsel %vm1020, %v1027, %v1029
      %v1033 = vsel %vm1020, %v1029, %v1031
      %1034 = vrot.lane.b32.xlu0 %v997, 126
      %v1035 = vpop.permute.xlu0 %1034
      %1036 = vrot.lane.b32.xlu0 %v1005, 126
      %v1037 = vpop.permute.xlu0 %1036
      %1038 = vrot.lane.b32.xlu0 %v1004, 126
      %v1039 = vpop.permute.xlu0 %1038
      %vm1040 = vcmask 1031168
      %v1041 = vsel %vm1040, %v1035, %v1037
      %v1042 = vsel %vm1040, %v1037, %v1039
      %1043 = vrot.lane.b32.xlu0 %v1009, 126
      %v1044 = vpop.permute.xlu0 %1043
      %1045 = vrot.lane.b32.xlu0 %v1010, 126
      %v1046 = vpop.permute.xlu0 %1045
      %1047 = vrot.lane.b32.xlu0 %v1011, 126
      %v1048 = vpop.permute.xlu0 %1047
      %v1049 = vsel %vm1040, %v1044, %v1046
      %v1050 = vsel %vm1040, %v1046, %v1048
      %vm1051 = vcmask 1041408
      %v1054 = vsel %vm1051, %v997, %v1009
      %v1057 = vsel %vm1051, %v1005, %v1010
      %v1060 = vsel %vm1051, %v1004, %v1011
      %v1062 = vsel %vm430, %v1054, %v1021
      %v1064 = vsel %vm430, %v1057, %v1022
      %v1066 = vsel %vm430, %v1060, %v1019
      %vm1067 = vcmask 1045504
      %v1069 = vsel %vm1067, %v1062, %v1032
      %v1072 = vsel %vm1067, %v1064, %v1033
      %v1075 = vsel %vm1067, %v1066, %v1031
      %v1079 = vsel %vm1051, %v1041, %v1049
      %v1082 = vsel %vm1051, %v1042, %v1050
      %v1085 = vsel %vm1051, %v1039, %v1048
      %v1086 = vld [vmem:[%s5] sm:$0xf]
      %s1087 = scalar_lea.vmem %s5, 4
      %v1088 = vld [vmem:[%s1087] sm:$0xf]
      %1095 = vrot.lane.b32.xlu0 %v1069, 110
      %v1096 = vpop.permute.xlu0 %1095
      %1097 = vrot.lane.b32.xlu0 %v1072, 110
      %v1098 = vpop.permute.xlu0 %1097
      %1099 = vrot.lane.b32.xlu0 %v1075, 110
      %v1100 = vpop.permute.xlu0 %1099
      %1101 = vrot.lane.b32.xlu0 %v1079, 110
      %v1102 = vpop.permute.xlu0 %1101
      %1103 = vrot.lane.b32.xlu0 %v1082, 110
      %v1104 = vpop.permute.xlu0 %1103
      %1105 = vrot.lane.b32.xlu0 %v1085, 110
      %v1106 = vpop.permute.xlu0 %1105
      %vm1107 = vcmask 900096
      %v1108 = vsel %vm1107, %v1096, %v1098
      %v1109 = vsel %vm1107, %v1098, %v1100
      %v1110 = vsel %vm1107, %v1102, %v1104
      %v1111 = vsel %vm1107, %v1104, %v1106
      %vm1115 = vcmask 195584
      %v1117 = vsel %vm1115, %v1088, 0
      %v1120 = vsel %vm430, %v1110, 0
      %v1123 = vsel %vm430, %v1111, 0
      %v1126 = vsel %vm430, %v1106, 0
      %1128 = vmatprep.subr.bf16.mxu0 %v1109
      %1129 = vmatpush1.bf16.msra.mxu0 %v1108
      %1130 = vmatprep.subr.bf16.mxu0 %v1123
      %1131 = vmatpush1.bf16.msra.mxu0 %v1120
      %1132 = vmatprep.subr.bf16.mxu0 0
      %1133 = vmatpush1.bf16.msra.mxu0 0
      %1134 = vmatprep.subr.bf16.mxu0 0
      %1135 = vmatpush1.bf16.msra.mxu0 0
      %1136 = vmatprep.subr.bf16.mxu0 0
      %1137 = vmatpush1.bf16.msra.mxu0 0
      %1138 = vmatprep.subr.bf16.mxu0 0
      %1139 = vmatpush1.bf16.msra.mxu0 0
      %1140 = vmatprep.subr.bf16.mxu0 0
      %1141 = vmatpush1.bf16.msra.mxu0 0
      %1142 = vmatprep.subr.bf16.mxu0 0
      %1143 = vmatpush1.bf16.msra.mxu0 0
      %1144 = vmatprep.subr.bf16.mxu0 0
      %1145 = vmatpush1.bf16.msra.mxu0 0
      %1146 = vmatprep.subr.bf16.mxu0 0
      %1147 = vmatpush1.bf16.msra.mxu0 0
      %1148 = vmatprep.subr.bf16.mxu0 0
      %1149 = vmatpush1.bf16.msra.mxu0 0
      %1150 = vmatprep.subr.bf16.mxu0 0
      %1151 = vmatpush1.bf16.msra.mxu0 0
      %1152 = vmatprep.subr.bf16.mxu0 0
      %1153 = vmatpush1.bf16.msra.mxu0 0
      %1154 = vmatprep.subr.bf16.mxu0 0
      %1155 = vmatpush1.bf16.msra.mxu0 0
      %1156 = vmatprep.subr.bf16.mxu0 0
      %1157 = vmatpush1.bf16.msra.mxu0 0
      %1158 = vmatprep.subr.bf16.mxu0 0
      %1159 = vmatpush1.bf16.msra.mxu0 0
      %1160 = vmatprep.mubr.bf16.mxu0 0
      %1161 = vmatmul.mubr.bf16.gmra.mrb[0].mxu0 %v1117
      %v1162 = vpop.f32.mrb[0].mxu0
      %v1163 = vadd.f32 0.0, %v1162
      %v1164 = vpop.f32.mrb[0].mxu0
      %v1165 = vadd.f32 0.0, %v1164
      %v1166 = vpop.f32.mrb[0].mxu0
      %v1167 = vpop.f32.mrb[0].mxu0
      %1168 = vdwg.mxu0
      %1169 = vmatprep.subr.bf16.mxu0 0
      %1170 = vmatpush1.bf16.msra.mxu0 %v1100
      %1171 = vmatprep.subr.bf16.mxu0 0
      %1172 = vmatpush1.bf16.msra.mxu0 %v1126
      %1173 = vmatprep.subr.bf16.mxu0 0
      %1174 = vmatpush1.bf16.msra.mxu0 0
      %1175 = vmatprep.subr.bf16.mxu0 0
      %1176 = vmatpush1.bf16.msra.mxu0 0
      %1177 = vmatprep.subr.bf16.mxu0 0
      %1178 = vmatpush1.bf16.msra.mxu0 0
      %1179 = vmatprep.subr.bf16.mxu0 0
      %1180 = vmatpush1.bf16.msra.mxu0 0
      %1181 = vmatprep.subr.bf16.mxu0 0
      %1182 = vmatpush1.bf16.msra.mxu0 0
      %1183 = vmatprep.subr.bf16.mxu0 0
      %1184 = vmatpush1.bf16.msra.mxu0 0
      %1185 = vmatprep.subr.bf16.mxu0 0
      %1186 = vmatpush1.bf16.msra.mxu0 0
      %1187 = vmatprep.subr.bf16.mxu0 0
      %1188 = vmatpush1.bf16.msra.mxu0 0
      %1189 = vmatprep.subr.bf16.mxu0 0
      %1190 = vmatpush1.bf16.msra.mxu0 0
      %1191 = vmatprep.subr.bf16.mxu0 0
      %1192 = vmatpush1.bf16.msra.mxu0 0
      %1193 = vmatprep.subr.bf16.mxu0 0
      %1194 = vmatpush1.bf16.msra.mxu0 0
      %1195 = vmatprep.subr.bf16.mxu0 0
      %1196 = vmatpush1.bf16.msra.mxu0 0
      %1197 = vmatprep.subr.bf16.mxu0 0
      %1198 = vmatpush1.bf16.msra.mxu0 0
      %1199 = vmatprep.subr.bf16.mxu0 0
      %1200 = vmatpush1.bf16.msra.mxu0 0
      %1201 = vmatprep.mubr.bf16.mxu0 0
      %1202 = vmatmul.mubr.bf16.gmra.mrb[0].mxu0 %v1117
      %v1203 = vpop.f32.mrb[0].mxu0
      %v1204 = vadd.f32 0.0, %v1203
      %v1205 = vpop.f32.mrb[0].mxu0
      %v1206 = vpop.f32.mrb[0].mxu0
      %v1207 = vpop.f32.mrb[0].mxu0
      %1208 = vdwg.mxu0
      %v1210 = vsel %vm1115, %v1086, 0
      %v1212 = vsel %vm430, %v1079, 0
      %v1214 = vsel %vm430, %v1082, 0
      %v1216 = vsel %vm430, %v1085, 0
      %1218 = vmatprep.subr.bf16.mxu0 %v1072
      %1219 = vmatpush1.bf16.msra.mxu0 %v1069
      %1220 = vmatprep.subr.bf16.mxu0 %v1214
      %1221 = vmatpush1.bf16.msra.mxu0 %v1212
      %1222 = vmatprep.subr.bf16.mxu0 0
      %1223 = vmatpush1.bf16.msra.mxu0 0
      %1224 = vmatprep.subr.bf16.mxu0 0
      %1225 = vmatpush1.bf16.msra.mxu0 0
      %1226 = vmatprep.subr.bf16.mxu0 0
      %1227 = vmatpush1.bf16.msra.mxu0 0
      %1228 = vmatprep.subr.bf16.mxu0 0
      %1229 = vmatpush1.bf16.msra.mxu0 0
      %1230 = vmatprep.subr.bf16.mxu0 0
      %1231 = vmatpush1.bf16.msra.mxu0 0
      %1232 = vmatprep.subr.bf16.mxu0 0
      %1233 = vmatpush1.bf16.msra.mxu0 0
      %1234 = vmatprep.subr.bf16.mxu0 0
      %1235 = vmatpush1.bf16.msra.mxu0 0
      %1236 = vmatprep.subr.bf16.mxu0 0
      %1237 = vmatpush1.bf16.msra.mxu0 0
      %1238 = vmatprep.subr.bf16.mxu0 0
      %1239 = vmatpush1.bf16.msra.mxu0 0
      %1240 = vmatprep.subr.bf16.mxu0 0
      %1241 = vmatpush1.bf16.msra.mxu0 0
      %1242 = vmatprep.subr.bf16.mxu0 0
      %1243 = vmatpush1.bf16.msra.mxu0 0
      %1244 = vmatprep.subr.bf16.mxu0 0
      %1245 = vmatpush1.bf16.msra.mxu0 0
      %1246 = vmatprep.subr.bf16.mxu0 0
      %1247 = vmatpush1.bf16.msra.mxu0 0
      %1248 = vmatprep.subr.bf16.mxu0 0
      %1249 = vmatpush1.bf16.msra.mxu0 0
      %1250 = vmatprep.mubr.bf16.mxu0 0
      %1251 = vmatmul.mubr.bf16.gmra.mrb[0].mxu0 %v1210
      %v1252 = vpop.f32.mrb[0].mxu0
      %v1253 = vadd.f32 %v1163, %v1252
      %v1254 = vpop.f32.mrb[0].mxu0
      %v1255 = vadd.f32 %v1165, %v1254
      %v1256 = vpop.f32.mrb[0].mxu0
      %v1257 = vpop.f32.mrb[0].mxu0
      %1258 = vdwg.mxu0
      %1259 = vmatprep.subr.bf16.mxu0 0
      %1260 = vmatpush1.bf16.msra.mxu0 %v1075
      %1261 = vmatprep.subr.bf16.mxu0 0
      %1262 = vmatpush1.bf16.msra.mxu0 %v1216
      %1263 = vmatprep.subr.bf16.mxu0 0
      %1264 = vmatpush1.bf16.msra.mxu0 0
      %1265 = vmatprep.subr.bf16.mxu0 0
      %1266 = vmatpush1.bf16.msra.mxu0 0
      %1267 = vmatprep.subr.bf16.mxu0 0
      %1268 = vmatpush1.bf16.msra.mxu0 0
      %1269 = vmatprep.subr.bf16.mxu0 0
      %1270 = vmatpush1.bf16.msra.mxu0 0
      %1271 = vmatprep.subr.bf16.mxu0 0
      %1272 = vmatpush1.bf16.msra.mxu0 0
      %1273 = vmatprep.subr.bf16.mxu0 0
      %1274 = vmatpush1.bf16.msra.mxu0 0
      %1275 = vmatprep.subr.bf16.mxu0 0
      %1276 = vmatpush1.bf16.msra.mxu0 0
      %1277 = vmatprep.subr.bf16.mxu0 0
      %1278 = vmatpush1.bf16.msra.mxu0 0
      %1279 = vmatprep.subr.bf16.mxu0 0
      %1280 = vmatpush1.bf16.msra.mxu0 0
      %1281 = vmatprep.subr.bf16.mxu0 0
      %1282 = vmatpush1.bf16.msra.mxu0 0
      %1283 = vmatprep.subr.bf16.mxu0 0
      %1284 = vmatpush1.bf16.msra.mxu0 0
      %1285 = vmatprep.subr.bf16.mxu0 0
      %1286 = vmatpush1.bf16.msra.mxu0 0
      %1287 = vmatprep.subr.bf16.mxu0 0
      %1288 = vmatpush1.bf16.msra.mxu0 0
      %1289 = vmatprep.subr.bf16.mxu0 0
      %1290 = vmatpush1.bf16.msra.mxu0 0
      %1291 = vmatprep.mubr.bf16.mxu0 0
      %1292 = vmatmul.mubr.bf16.gmra.mrb[0].mxu0 %v1210
      %v1293 = vpop.f32.mrb[0].mxu0
      %v1294 = vadd.f32 %v1204, %v1293
      %v1295 = vpop.f32.mrb[0].mxu0
      %v1296 = vpop.f32.mrb[0].mxu0
      %v1297 = vpop.f32.mrb[0].mxu0
      %1298 = vdwg.mxu0
      %s1299 = scalar_lea.vmem %s5, 8
      %v1300 = vld [vmem:[%s1299] sm:$0xf]
      %1301 = vrot.lane.b32.xlu0 %v1069, 92
      %v1302 = vpop.permute.xlu0 %1301
      %1303 = vrot.lane.b32.xlu0 %v1072, 92
      %v1304 = vpop.permute.xlu0 %1303
      %1305 = vrot.lane.b32.xlu0 %v1075, 92
      %v1306 = vpop.permute.xlu0 %1305
      %1307 = vrot.lane.b32.xlu0 %v1079, 92
      %v1308 = vpop.permute.xlu0 %1307
      %1309 = vrot.lane.b32.xlu0 %v1082, 92
      %v1310 = vpop.permute.xlu0 %1309
      %1311 = vrot.lane.b32.xlu0 %v1085, 92
      %v1312 = vpop.permute.xlu0 %1311
      %vm1313 = vcmask 752640
      %v1314 = vsel %vm1313, %v1302, %v1304
      %v1315 = vsel %vm1313, %v1304, %v1306
      %v1316 = vsel %vm1313, %v1308, %v1310
      %v1317 = vsel %vm1313, %v1310, %v1312
      %v1322 = vsel %vm1115, %v1300, 0
      %v1325 = vsel %vm430, %v1316, 0
      %v1328 = vsel %vm430, %v1317, 0
      %v1331 = vsel %vm430, %v1312, 0
      %1333 = vmatprep.subr.bf16.mxu0 %v1315
      %1334 = vmatpush1.bf16.msra.mxu0 %v1314
      %1335 = vmatprep.subr.bf16.mxu0 %v1328
      %1336 = vmatpush1.bf16.msra.mxu0 %v1325
      %1337 = vmatprep.subr.bf16.mxu0 0
      %1338 = vmatpush1.bf16.msra.mxu0 0
      %1339 = vmatprep.subr.bf16.mxu0 0
      %1340 = vmatpush1.bf16.msra.mxu0 0
      %1341 = vmatprep.subr.bf16.mxu0 0
      %1342 = vmatpush1.bf16.msra.mxu0 0
      %1343 = vmatprep.subr.bf16.mxu0 0
      %1344 = vmatpush1.bf16.msra.mxu0 0
      %1345 = vmatprep.subr.bf16.mxu0 0
      %1346 = vmatpush1.bf16.msra.mxu0 0
      %1347 = vmatprep.subr.bf16.mxu0 0
      %1348 = vmatpush1.bf16.msra.mxu0 0
      %1349 = vmatprep.subr.bf16.mxu0 0
      %1350 = vmatpush1.bf16.msra.mxu0 0
      %1351 = vmatprep.subr.bf16.mxu0 0
      %1352 = vmatpush1.bf16.msra.mxu0 0
      %1353 = vmatprep.subr.bf16.mxu0 0
      %1354 = vmatpush1.bf16.msra.mxu0 0
      %1355 = vmatprep.subr.bf16.mxu0 0
      %1356 = vmatpush1.bf16.msra.mxu0 0
      %1357 = vmatprep.subr.bf16.mxu0 0
      %1358 = vmatpush1.bf16.msra.mxu0 0
      %1359 = vmatprep.subr.bf16.mxu0 0
      %1360 = vmatpush1.bf16.msra.mxu0 0
      %1361 = vmatprep.subr.bf16.mxu0 0
      %1362 = vmatpush1.bf16.msra.mxu0 0
      %1363 = vmatprep.subr.bf16.mxu0 0
      %1364 = vmatpush1.bf16.msra.mxu0 0
      %1365 = vmatprep.mubr.bf16.mxu0 0
      %1366 = vmatmul.mubr.bf16.gmra.mrb[0].mxu0 %v1322
      %v1367 = vpop.f32.mrb[0].mxu0
      %v1368 = vadd.f32 0.0, %v1367
      %v1369 = vpop.f32.mrb[0].mxu0
      %v1370 = vadd.f32 0.0, %v1369
      %v1371 = vpop.f32.mrb[0].mxu0
      %v1372 = vpop.f32.mrb[0].mxu0
      %1373 = vdwg.mxu0
      %1374 = vmatprep.subr.bf16.mxu0 0
      %1375 = vmatpush1.bf16.msra.mxu0 %v1306
      %1376 = vmatprep.subr.bf16.mxu0 0
      %1377 = vmatpush1.bf16.msra.mxu0 %v1331
      %1378 = vmatprep.subr.bf16.mxu0 0
      %1379 = vmatpush1.bf16.msra.mxu0 0
      %1380 = vmatprep.subr.bf16.mxu0 0
      %1381 = vmatpush1.bf16.msra.mxu0 0
      %1382 = vmatprep.subr.bf16.mxu0 0
      %1383 = vmatpush1.bf16.msra.mxu0 0
      %1384 = vmatprep.subr.bf16.mxu0 0
      %1385 = vmatpush1.bf16.msra.mxu0 0
      %1386 = vmatprep.subr.bf16.mxu0 0
      %1387 = vmatpush1.bf16.msra.mxu0 0
      %1388 = vmatprep.subr.bf16.mxu0 0
      %1389 = vmatpush1.bf16.msra.mxu0 0
      %1390 = vmatprep.subr.bf16.mxu0 0
      %1391 = vmatpush1.bf16.msra.mxu0 0
      %1392 = vmatprep.subr.bf16.mxu0 0
      %1393 = vmatpush1.bf16.msra.mxu0 0
      %1394 = vmatprep.subr.bf16.mxu0 0
      %1395 = vmatpush1.bf16.msra.mxu0 0
      %1396 = vmatprep.subr.bf16.mxu0 0
      %1397 = vmatpush1.bf16.msra.mxu0 0
      %1398 = vmatprep.subr.bf16.mxu0 0
      %1399 = vmatpush1.bf16.msra.mxu0 0
      %1400 = vmatprep.subr.bf16.mxu0 0
      %1401 = vmatpush1.bf16.msra.mxu0 0
      %1402 = vmatprep.subr.bf16.mxu0 0
      %1403 = vmatpush1.bf16.msra.mxu0 0
      %1404 = vmatprep.subr.bf16.mxu0 0
      %1405 = vmatpush1.bf16.msra.mxu0 0
      %1406 = vmatprep.mubr.bf16.mxu0 0
      %1407 = vmatmul.mubr.bf16.gmra.mrb[0].mxu0 %v1322
      %v1408 = vpop.f32.mrb[0].mxu0
      %v1409 = vadd.f32 0.0, %v1408
      %v1410 = vpop.f32.mrb[0].mxu0
      %v1411 = vpop.f32.mrb[0].mxu0
      %v1412 = vpop.f32.mrb[0].mxu0
      %1413 = vdwg.mxu0
      %v1414 = vadd.f32 %v1253, %v1368
      %v1415 = vadd.f32 %v1255, %v1370
      %v1416 = vadd.f32 %v1294, %v1409
      %v1417 = vld [vmem:[%s6] sm:$0xff]
      %1419 = vset.pattern.permute.xlu0 0
      %1420 = vperm.xlu0 %1419, %v1417
      %v1421 = vpop.permute.xlu0 %1420
      %v1423 = vmul.f32 %v1414, %v1421
      %v1424 = vmul.f32 %v1415, %v1421
      %v1425 = vmul.f32 %v1416, %v1421
      %v1426 = vld [vmem:[%s7] sm:$0xff]
      %1428 = vset.pattern.permute.xlu0 0
      %1429 = vperm.xlu0 %1428, %v1426
      %v1430 = vpop.permute.xlu0 %1429
      %v1432 = vadd.f32 %v1423, %v1430
      %v1433 = vadd.f32 %v1424, %v1430
      %v1434 = vadd.f32 %v1425, %v1430
      %v1435 = vmax.f32 %v1432, 0.0
      %v1436 = vmax.f32 %v1433, 0.0
      %v1437 = vmax.f32 %v1434, 0.0
      %v1438 = vld [vmem:[%s4] sm:$0x7]
      %v1440 = vlaneseq
      %v1441 = vshrl.u32 %v1440, 7
      %v1442 = vsub.s32 0, %v1441
      %v1443 = vrot.slane %v1438, %v1442
      %v1444 = vlaneseq
      %v1445 = vshrl.u32 %v1444, 7
      %v1446 = vsub.s32 1, %v1445
      %v1447 = vrot.slane %v1438, %v1446
      %v1448 = vlaneseq
      %v1449 = vshrl.u32 %v1448, 7
      %v1450 = vsub.s32 2, %v1449
      %v1451 = vrot.slane %v1438, %v1450
      %v1455 = vmul.f32 %v1435, %v1443
      %v1456 = vmul.f32 %v1436, %v1447
      %v1457 = vmul.f32 %v1437, %v1451
      %v1458 = vpack.c.bf16 %v1455, %v1455
      %v1459 = vpack.c.bf16 %v1456, %v1456
      %v1460 = vpack.c.bf16 %v1457, %v1457
      %1464 = vrot.lane.b32.xlu0 %v1458, 19
      %v1465 = vpop.permute.xlu0 %1464
      %1466 = vrot.lane.b32.xlu0 %v1459, 19
      %v1467 = vpop.permute.xlu0 %1466
      %1468 = vrot.lane.b32.xlu0 %v1460, 19
      %v1469 = vpop.permute.xlu0 %1468
      %vm1470 = vcmask 154624
      %v1471 = vsel %vm1470, %v1465, %v1467
      %v1472 = vsel %vm1470, %v1467, %v1469
      %vm1473 = vcmask 154624
      %v1476 = vsel %vm1473, 0, %v1465
      %vm1477 = vcmask 416768
      %v1479 = vsel %vm1477, %v1472, 0
      %v1482 = vrot.slane %v1476, 4
      %v1483 = vrot.slane %v1471, 4
      %v1484 = vrot.slane %v1479, 4
      %1485 = vrot.lane.b32.xlu0 %v1482, 127
      %v1486 = vpop.permute.xlu0 %1485
      %1487 = vrot.lane.b32.xlu0 %v1483, 127
      %v1488 = vpop.permute.xlu0 %1487
      %1489 = vrot.lane.b32.xlu0 %v1484, 127
      %v1490 = vpop.permute.xlu0 %1489
      %v1491 = vsel %vm1020, %v1486, %v1488
      %v1492 = vsel %vm1020, %v1488, %v1490
      %1493 = vrot.lane.b32.xlu0 %v1476, 126
      %v1494 = vpop.permute.xlu0 %1493
      %1495 = vrot.lane.b32.xlu0 %v1471, 126
      %v1496 = vpop.permute.xlu0 %1495
      %1497 = vrot.lane.b32.xlu0 %v1479, 126
      %v1498 = vpop.permute.xlu0 %1497
      %v1499 = vsel %vm1040, %v1494, %v1496
      %v1500 = vsel %vm1040, %v1496, %v1498
      %v1502 = vsel %vm430, %v1476, %v1491
      %v1506 = vsel %vm430, %v1471, %v1492
      %v1509 = vsel %vm430, %v1479, %v1490
      %v1511 = vld [vmem:[%s8] sm:$0xf]
      %s1512 = scalar_lea.vmem %s8, 4
      %v1513 = vld [vmem:[%s1512] sm:$0xf]
      %1517 = vrot.lane.b32.xlu0 %v1502, 110
      %v1518 = vpop.permute.xlu0 %1517
      %1519 = vrot.lane.b32.xlu0 %v1506, 110
      %v1520 = vpop.permute.xlu0 %1519
      %1521 = vrot.lane.b32.xlu0 %v1509, 110
      %v1522 = vpop.permute.xlu0 %1521
      %1523 = vrot.lane.b32.xlu0 %v1499, 110
      %v1524 = vpop.permute.xlu0 %1523
      %1525 = vrot.lane.b32.xlu0 %v1500, 110
      %v1526 = vpop.permute.xlu0 %1525
      %1527 = vrot.lane.b32.xlu0 %v1498, 110
      %v1528 = vpop.permute.xlu0 %1527
      %v1529 = vsel %vm1107, %v1518, %v1520
      %v1530 = vsel %vm1107, %v1520, %v1522
      %v1531 = vsel %vm1107, %v1524, %v1526
      %v1532 = vsel %vm1107, %v1526, %v1528
      %v1537 = vsel %vm1115, %v1513, 0
      %v1540 = vsel %vm430, %v1531, 0
      %v1543 = vsel %vm430, %v1532, 0
      %v1546 = vsel %vm430, %v1528, 0
      %1548 = vmatprep.subr.bf16.mxu0 %v1530
      %1549 = vmatpush1.bf16.msra.mxu0 %v1529
      %1550 = vmatprep.subr.bf16.mxu0 %v1543
      %1551 = vmatpush1.bf16.msra.mxu0 %v1540
      %1552 = vmatprep.subr.bf16.mxu0 0
      %1553 = vmatpush1.bf16.msra.mxu0 0
      %1554 = vmatprep.subr.bf16.mxu0 0
      %1555 = vmatpush1.bf16.msra.mxu0 0
      %1556 = vmatprep.subr.bf16.mxu0 0
      %1557 = vmatpush1.bf16.msra.mxu0 0
      %1558 = vmatprep.subr.bf16.mxu0 0
      %1559 = vmatpush1.bf16.msra.mxu0 0
      %1560 = vmatprep.subr.bf16.mxu0 0
      %1561 = vmatpush1.bf16.msra.mxu0 0
      %1562 = vmatprep.subr.bf16.mxu0 0
      %1563 = vmatpush1.bf16.msra.mxu0 0
      %1564 = vmatprep.subr.bf16.mxu0 0
      %1565 = vmatpush1.bf16.msra.mxu0 0
      %1566 = vmatprep.subr.bf16.mxu0 0
      %1567 = vmatpush1.bf16.msra.mxu0 0
      %1568 = vmatprep.subr.bf16.mxu0 0
      %1569 = vmatpush1.bf16.msra.mxu0 0
      %1570 = vmatprep.subr.bf16.mxu0 0
      %1571 = vmatpush1.bf16.msra.mxu0 0
      %1572 = vmatprep.subr.bf16.mxu0 0
      %1573 = vmatpush1.bf16.msra.mxu0 0
      %1574 = vmatprep.subr.bf16.mxu0 0
      %1575 = vmatpush1.bf16.msra.mxu0 0
      %1576 = vmatprep.subr.bf16.mxu0 0
      %1577 = vmatpush1.bf16.msra.mxu0 0
      %1578 = vmatprep.subr.bf16.mxu0 0
      %1579 = vmatpush1.bf16.msra.mxu0 0
      %1580 = vmatprep.mubr.bf16.mxu0 0
      %1581 = vmatmul.mubr.bf16.gmra.mrb[0].mxu0 %v1537
      %v1582 = vpop.f32.mrb[0].mxu0
      %v1583 = vadd.f32 0.0, %v1582
      %v1584 = vpop.f32.mrb[0].mxu0
      %v1585 = vadd.f32 0.0, %v1584
      %v1586 = vpop.f32.mrb[0].mxu0
      %v1587 = vpop.f32.mrb[0].mxu0
      %1588 = vdwg.mxu0
      %1589 = vmatprep.subr.bf16.mxu0 0
      %1590 = vmatpush1.bf16.msra.mxu0 %v1522
      %1591 = vmatprep.subr.bf16.mxu0 0
      %1592 = vmatpush1.bf16.msra.mxu0 %v1546
      %1593 = vmatprep.subr.bf16.mxu0 0
      %1594 = vmatpush1.bf16.msra.mxu0 0
      %1595 = vmatprep.subr.bf16.mxu0 0
      %1596 = vmatpush1.bf16.msra.mxu0 0
      %1597 = vmatprep.subr.bf16.mxu0 0
      %1598 = vmatpush1.bf16.msra.mxu0 0
      %1599 = vmatprep.subr.bf16.mxu0 0
      %1600 = vmatpush1.bf16.msra.mxu0 0
      %1601 = vmatprep.subr.bf16.mxu0 0
      %1602 = vmatpush1.bf16.msra.mxu0 0
      %1603 = vmatprep.subr.bf16.mxu0 0
      %1604 = vmatpush1.bf16.msra.mxu0 0
      %1605 = vmatprep.subr.bf16.mxu0 0
      %1606 = vmatpush1.bf16.msra.mxu0 0
      %1607 = vmatprep.subr.bf16.mxu0 0
      %1608 = vmatpush1.bf16.msra.mxu0 0
      %1609 = vmatprep.subr.bf16.mxu0 0
      %1610 = vmatpush1.bf16.msra.mxu0 0
      %1611 = vmatprep.subr.bf16.mxu0 0
      %1612 = vmatpush1.bf16.msra.mxu0 0
      %1613 = vmatprep.subr.bf16.mxu0 0
      %1614 = vmatpush1.bf16.msra.mxu0 0
      %1615 = vmatprep.subr.bf16.mxu0 0
      %1616 = vmatpush1.bf16.msra.mxu0 0
      %1617 = vmatprep.subr.bf16.mxu0 0
      %1618 = vmatpush1.bf16.msra.mxu0 0
      %1619 = vmatprep.subr.bf16.mxu0 0
      %1620 = vmatpush1.bf16.msra.mxu0 0
      %1621 = vmatprep.mubr.bf16.mxu0 0
      %1622 = vmatmul.mubr.bf16.gmra.mrb[0].mxu0 %v1537
      %v1623 = vpop.f32.mrb[0].mxu0
      %v1624 = vadd.f32 0.0, %v1623
      %v1625 = vpop.f32.mrb[0].mxu0
      %v1626 = vpop.f32.mrb[0].mxu0
      %v1627 = vpop.f32.mrb[0].mxu0
      %1628 = vdwg.mxu0
      %v1630 = vsel %vm1115, %v1511, 0
      %v1633 = vsel %vm430, %v1499, 0
      %v1636 = vsel %vm430, %v1500, 0
      %v1639 = vsel %vm430, %v1498, 0
      %1641 = vmatprep.subr.bf16.mxu0 %v1506
      %1642 = vmatpush1.bf16.msra.mxu0 %v1502
      %1643 = vmatprep.subr.bf16.mxu0 %v1636
      %1644 = vmatpush1.bf16.msra.mxu0 %v1633
      %1645 = vmatprep.subr.bf16.mxu0 0
      %1646 = vmatpush1.bf16.msra.mxu0 0
      %1647 = vmatprep.subr.bf16.mxu0 0
      %1648 = vmatpush1.bf16.msra.mxu0 0
      %1649 = vmatprep.subr.bf16.mxu0 0
      %1650 = vmatpush1.bf16.msra.mxu0 0
      %1651 = vmatprep.subr.bf16.mxu0 0
      %1652 = vmatpush1.bf16.msra.mxu0 0
      %1653 = vmatprep.subr.bf16.mxu0 0
      %1654 = vmatpush1.bf16.msra.mxu0 0
      %1655 = vmatprep.subr.bf16.mxu0 0
      %1656 = vmatpush1.bf16.msra.mxu0 0
      %1657 = vmatprep.subr.bf16.mxu0 0
      %1658 = vmatpush1.bf16.msra.mxu0 0
      %1659 = vmatprep.subr.bf16.mxu0 0
      %1660 = vmatpush1.bf16.msra.mxu0 0
      %1661 = vmatprep.subr.bf16.mxu0 0
      %1662 = vmatpush1.bf16.msra.mxu0 0
      %1663 = vmatprep.subr.bf16.mxu0 0
      %1664 = vmatpush1.bf16.msra.mxu0 0
      %1665 = vmatprep.subr.bf16.mxu0 0
      %1666 = vmatpush1.bf16.msra.mxu0 0
      %1667 = vmatprep.subr.bf16.mxu0 0
      %1668 = vmatpush1.bf16.msra.mxu0 0
      %1669 = vmatprep.subr.bf16.mxu0 0
      %1670 = vmatpush1.bf16.msra.mxu0 0
      %1671 = vmatprep.subr.bf16.mxu0 0
      %1672 = vmatpush1.bf16.msra.mxu0 0
      %1673 = vmatprep.mubr.bf16.mxu0 0
      %1674 = vmatmul.mubr.bf16.gmra.mrb[0].mxu0 %v1630
      %v1675 = vpop.f32.mrb[0].mxu0
      %v1676 = vadd.f32 %v1583, %v1675
      %v1677 = vpop.f32.mrb[0].mxu0
      %v1678 = vadd.f32 %v1585, %v1677
      %v1679 = vpop.f32.mrb[0].mxu0
      %v1680 = vpop.f32.mrb[0].mxu0
      %1681 = vdwg.mxu0
      %1682 = vmatprep.subr.bf16.mxu0 0
      %1683 = vmatpush1.bf16.msra.mxu0 %v1509
      %1684 = vmatprep.subr.bf16.mxu0 0
      %1685 = vmatpush1.bf16.msra.mxu0 %v1639
      %1686 = vmatprep.subr.bf16.mxu0 0
      %1687 = vmatpush1.bf16.msra.mxu0 0
      %1688 = vmatprep.subr.bf16.mxu0 0
      %1689 = vmatpush1.bf16.msra.mxu0 0
      %1690 = vmatprep.subr.bf16.mxu0 0
      %1691 = vmatpush1.bf16.msra.mxu0 0
      %1692 = vmatprep.subr.bf16.mxu0 0
      %1693 = vmatpush1.bf16.msra.mxu0 0
      %1694 = vmatprep.subr.bf16.mxu0 0
      %1695 = vmatpush1.bf16.msra.mxu0 0
      %1696 = vmatprep.subr.bf16.mxu0 0
      %1697 = vmatpush1.bf16.msra.mxu0 0
      %1698 = vmatprep.subr.bf16.mxu0 0
      %1699 = vmatpush1.bf16.msra.mxu0 0
      %1700 = vmatprep.subr.bf16.mxu0 0
      %1701 = vmatpush1.bf16.msra.mxu0 0
      %1702 = vmatprep.subr.bf16.mxu0 0
      %1703 = vmatpush1.bf16.msra.mxu0 0
      %1704 = vmatprep.subr.bf16.mxu0 0
      %1705 = vmatpush1.bf16.msra.mxu0 0
      %1706 = vmatprep.subr.bf16.mxu0 0
      %1707 = vmatpush1.bf16.msra.mxu0 0
      %1708 = vmatprep.subr.bf16.mxu0 0
      %1709 = vmatpush1.bf16.msra.mxu0 0
      %1710 = vmatprep.subr.bf16.mxu0 0
      %1711 = vmatpush1.bf16.msra.mxu0 0
      %1712 = vmatprep.subr.bf16.mxu0 0
      %1713 = vmatpush1.bf16.msra.mxu0 0
      %1714 = vmatprep.mubr.bf16.mxu0 0
      %1715 = vmatmul.mubr.bf16.gmra.mrb[0].mxu0 %v1630
      %v1716 = vpop.f32.mrb[0].mxu0
      %v1717 = vadd.f32 %v1624, %v1716
      %v1718 = vpop.f32.mrb[0].mxu0
      %v1719 = vpop.f32.mrb[0].mxu0
      %v1720 = vpop.f32.mrb[0].mxu0
      %1721 = vdwg.mxu0
      %s1722 = scalar_lea.vmem %s8, 8
      %v1723 = vld [vmem:[%s1722] sm:$0xf]
      %1724 = vrot.lane.b32.xlu0 %v1502, 92
      %v1725 = vpop.permute.xlu0 %1724
      %1726 = vrot.lane.b32.xlu0 %v1506, 92
      %v1727 = vpop.permute.xlu0 %1726
      %1728 = vrot.lane.b32.xlu0 %v1509, 92
      %v1729 = vpop.permute.xlu0 %1728
      %1730 = vrot.lane.b32.xlu0 %v1499, 92
      %v1731 = vpop.permute.xlu0 %1730
      %1732 = vrot.lane.b32.xlu0 %v1500, 92
      %v1733 = vpop.permute.xlu0 %1732
      %1734 = vrot.lane.b32.xlu0 %v1498, 92
      %v1735 = vpop.permute.xlu0 %1734
      %v1736 = vsel %vm1313, %v1725, %v1727
      %v1737 = vsel %vm1313, %v1727, %v1729
      %v1738 = vsel %vm1313, %v1731, %v1733
      %v1739 = vsel %vm1313, %v1733, %v1735
      %v1744 = vsel %vm1115, %v1723, 0
      %v1747 = vsel %vm430, %v1738, 0
      %v1750 = vsel %vm430, %v1739, 0
      %v1753 = vsel %vm430, %v1735, 0
      %1755 = vmatprep.subr.bf16.mxu0 %v1737
      %1756 = vmatpush1.bf16.msra.mxu0 %v1736
      %1757 = vmatprep.subr.bf16.mxu0 %v1750
      %1758 = vmatpush1.bf16.msra.mxu0 %v1747
      %1759 = vmatprep.subr.bf16.mxu0 0
      %1760 = vmatpush1.bf16.msra.mxu0 0
      %1761 = vmatprep.subr.bf16.mxu0 0
      %1762 = vmatpush1.bf16.msra.mxu0 0
      %1763 = vmatprep.subr.bf16.mxu0 0
      %1764 = vmatpush1.bf16.msra.mxu0 0
      %1765 = vmatprep.subr.bf16.mxu0 0
      %1766 = vmatpush1.bf16.msra.mxu0 0
      %1767 = vmatprep.subr.bf16.mxu0 0
      %1768 = vmatpush1.bf16.msra.mxu0 0
      %1769 = vmatprep.subr.bf16.mxu0 0
      %1770 = vmatpush1.bf16.msra.mxu0 0
      %1771 = vmatprep.subr.bf16.mxu0 0
      %1772 = vmatpush1.bf16.msra.mxu0 0
      %1773 = vmatprep.subr.bf16.mxu0 0
      %1774 = vmatpush1.bf16.msra.mxu0 0
      %1775 = vmatprep.subr.bf16.mxu0 0
      %1776 = vmatpush1.bf16.msra.mxu0 0
      %1777 = vmatprep.subr.bf16.mxu0 0
      %1778 = vmatpush1.bf16.msra.mxu0 0
      %1779 = vmatprep.subr.bf16.mxu0 0
      %1780 = vmatpush1.bf16.msra.mxu0 0
      %1781 = vmatprep.subr.bf16.mxu0 0
      %1782 = vmatpush1.bf16.msra.mxu0 0
      %1783 = vmatprep.subr.bf16.mxu0 0
      %1784 = vmatpush1.bf16.msra.mxu0 0
      %1785 = vmatprep.subr.bf16.mxu0 0
      %1786 = vmatpush1.bf16.msra.mxu0 0
      %1787 = vmatprep.mubr.bf16.mxu0 0
      %1788 = vmatmul.mubr.bf16.gmra.mrb[0].mxu0 %v1744
      %v1789 = vpop.f32.mrb[0].mxu0
      %v1790 = vadd.f32 0.0, %v1789
      %v1791 = vpop.f32.mrb[0].mxu0
      %v1792 = vadd.f32 0.0, %v1791
      %v1793 = vpop.f32.mrb[0].mxu0
      %v1794 = vpop.f32.mrb[0].mxu0
      %1795 = vdwg.mxu0
      %1796 = vmatprep.subr.bf16.mxu0 0
      %1797 = vmatpush1.bf16.msra.mxu0 %v1729
      %1798 = vmatprep.subr.bf16.mxu0 0
      %1799 = vmatpush1.bf16.msra.mxu0 %v1753
      %1800 = vmatprep.subr.bf16.mxu0 0
      %1801 = vmatpush1.bf16.msra.mxu0 0
      %1802 = vmatprep.subr.bf16.mxu0 0
      %1803 = vmatpush1.bf16.msra.mxu0 0
      %1804 = vmatprep.subr.bf16.mxu0 0
      %1805 = vmatpush1.bf16.msra.mxu0 0
      %1806 = vmatprep.subr.bf16.mxu0 0
      %1807 = vmatpush1.bf16.msra.mxu0 0
      %1808 = vmatprep.subr.bf16.mxu0 0
      %1809 = vmatpush1.bf16.msra.mxu0 0
      %1810 = vmatprep.subr.bf16.mxu0 0
      %1811 = vmatpush1.bf16.msra.mxu0 0
      %1812 = vmatprep.subr.bf16.mxu0 0
      %1813 = vmatpush1.bf16.msra.mxu0 0
      %1814 = vmatprep.subr.bf16.mxu0 0
      %1815 = vmatpush1.bf16.msra.mxu0 0
      %1816 = vmatprep.subr.bf16.mxu0 0
      %1817 = vmatpush1.bf16.msra.mxu0 0
      %1818 = vmatprep.subr.bf16.mxu0 0
      %1819 = vmatpush1.bf16.msra.mxu0 0
      %1820 = vmatprep.subr.bf16.mxu0 0
      %1821 = vmatpush1.bf16.msra.mxu0 0
      %1822 = vmatprep.subr.bf16.mxu0 0
      %1823 = vmatpush1.bf16.msra.mxu0 0
      %1824 = vmatprep.subr.bf16.mxu0 0
      %1825 = vmatpush1.bf16.msra.mxu0 0
      %1826 = vmatprep.subr.bf16.mxu0 0
      %1827 = vmatpush1.bf16.msra.mxu0 0
      %1828 = vmatprep.mubr.bf16.mxu0 0
      %1829 = vmatmul.mubr.bf16.gmra.mrb[0].mxu0 %v1744
      %v1830 = vpop.f32.mrb[0].mxu0
      %v1831 = vadd.f32 0.0, %v1830
      %v1832 = vpop.f32.mrb[0].mxu0
      %v1833 = vpop.f32.mrb[0].mxu0
      %v1834 = vpop.f32.mrb[0].mxu0
      %1835 = vdwg.mxu0
      %v1836 = vadd.f32 %v1676, %v1790
      %v1837 = vadd.f32 %v1678, %v1792
      %v1838 = vadd.f32 %v1717, %v1831
      %v1839 = vld [vmem:[%s9] sm:$0xff]
      %1841 = vset.pattern.permute.xlu0 0
      %1842 = vperm.xlu0 %1841, %v1839
      %v1843 = vpop.permute.xlu0 %1842
      %v1845 = vmul.f32 %v1836, %v1843
      %v1846 = vmul.f32 %v1837, %v1843
      %v1847 = vmul.f32 %v1838, %v1843
      %v1848 = vld [vmem:[%s10] sm:$0xff]
      %1850 = vset.pattern.permute.xlu0 0
      %1851 = vperm.xlu0 %1850, %v1848
      %v1852 = vpop.permute.xlu0 %1851
      %v1854 = vadd.f32 %v1845, %v1852
      %v1855 = vadd.f32 %v1846, %v1852
      %v1856 = vadd.f32 %v1847, %v1852
      %v1857 = vmax.f32 %v1854, 0.0
      %v1858 = vmax.f32 %v1855, 0.0
      %v1859 = vmax.f32 %v1856, 0.0
      %1860 = vst [vmem:[%s406] sm:$0xff] %v1857
      %1861 = vst [vmem:[%s406 + $0x8] sm:$0xff] %v1858
      %1862 = vst.msk [vmem:[%s406 + $0x10] sm:$0xff] %vm979, %v1859
      %p1863 = scmp.lt.s32.totalorder %s22, 1
      %s1864 = scalar_select %p1863, %s22, 1
      %s1865 = smul.addr %s1864, 3
      %s1866 = smul.addr %s1865, 8
      %s1867 = scalar_lea.vmem %s11, %s1866
      // Predicated region
      $region65: #{_lambda_.1} parent=63 // pred_check
        %p1868 = pneg %p281
      $region66: #{_lambda_.1} parent=63 // pred_check_branch
        %1870 = sbr.rel (%p1868) target = $region68
      $region67: #{_lambda_.1} parent=63 // pred_region
        _
      $region68: #{_lambda_.1} parent=63 // pred_fallthru
        _
    $region64: #{_lambda_.1} parent=5 // pred_fallthru
      _
    %p1871 = scmp.le.s32.totalorder 2, %s17
    // Predicated region
    $region69: #{_lambda_.1} parent=5 // pred_check
      %p1872 = pneg %p1871
    $region70: #{_lambda_.1} parent=5 // pred_check_branch
      %1874 = sbr.rel (%p1872) target = $region72
    $region71: #{_lambda_.1} parent=5 // pred_region
      %s1875 = ssub.s32 %s17, 2
      // Predicated region
      $region73: #{_lambda_.1} parent=71 // pred_check
        %p1876 = pneg %p287
      $region74: #{_lambda_.1} parent=71 // pred_check_branch
        %1878 = sbr.rel (%p1876) target = $region76
      $region75: #{_lambda_.1} parent=71 // pred_region
        %p1879 = scmp.lt.s32.totalorder %s23, 1
        %s1880 = scalar_select %p1879, %s23, 1
        %s1881 = smul.addr %s1880, 3
        %s1882 = smul.addr %s1881, 8
        %s1883 = scalar_lea.vmem %s11, %s1882
      $region76: #{_lambda_.1} parent=71 // pred_fallthru
        _
    $region72: #{_lambda_.1} parent=5 // pred_fallthru
      _
  $region6: #{_lambda_.1} parent=0 // loop_footer
    %s21 = sadd.s32 1, %s17
  $region7: #{_lambda_.1} parent=0 // loop_footer_branch
    %16 = sbr.rel target = $region3
  $region8: #{_lambda_.1} parent=0 // loop_exit
    _

</llo_original>
